<compile_context>
chip_gen: v5e
topology: v5e:2x2
jax: 0.10.0
libtpu: 0.0.40
codegen_flags: <defaults>
</compile_context>

<pallas_src>
import math
import functools

import jax
import jax.numpy as jnp
from jax import lax
from jax.experimental import pallas as pl
from jax.experimental.pallas import tpu as pltpu  # noqa: F401

# Scaled-down config (module default is d_model=768, n_heads=12).  We keep
# d_model a multiple of 128 for lane alignment and shrink for the demo.
D_MODEL = 128
N_HEADS = 4
HEAD_DIM = D_MODEL // N_HEADS
D_FF = 4 * D_MODEL
SEQ = 8
BATCH = 2
LN_EPS = 1e-5

MXU_DTYPE = jnp.bfloat16      # matmul-operand dtype (set to jnp.float32 for exact f32)
NEG_INF = -1e30               # finite "minus infinity" for the batch mask


def _layer_norm(h, gamma, beta):
    # PyTorch LayerNorm: biased variance, eps inside rsqrt.
    mu = jnp.mean(h, axis=-1, keepdims=True)
    var = jnp.mean((h - mu) ** 2, axis=-1, keepdims=True)
    return (h - mu) * lax.rsqrt(var + LN_EPS) * gamma + beta


def _gelu_exact(x):
    # nn.GELU() default is the exact erf formulation.
    return 0.5 * x * (1.0 + lax.erf(x * (1.0 / math.sqrt(2.0))))


def decoder_layer_kernel(
    x_ref,                    # (T, E) f32, T = seq*batch, row t = l*batch + n
    wqkv_ref, bqkv_ref,       # (E, 3E) bf16 fused in_proj (pre-transposed), (1, 3E) f32
    wo_ref, bo_ref,           # (E, E) bf16, (1, E) f32
    g1_ref, be1_ref,          # (1, E) f32 LayerNorm1 weight/bias
    w1_ref, bf1_ref,          # (E, 4E) bf16, (1, 4E) f32
    w2_ref, bf2_ref,          # (4E, E) bf16, (1, E) f32
    g2_ref, be2_ref,          # (1, E) f32 LayerNorm2 weight/bias
    o_ref,                    # (T, E) f32
    *,
    n_batch, n_heads, head_dim,
):
    x = x_ref[...]                                     # (T, E) f32
    t_tokens, e = x.shape

    # ---- fused QKV projection: one (T,E)@(E,3E) MXU matmul (bf16 in, f32 acc) ----
    qkv = jnp.dot(x.astype(MXU_DTYPE), wqkv_ref[...],
                  preferred_element_type=jnp.float32) + bqkv_ref[...]
    q = qkv[:, :e]
    k = qkv[:, e:2 * e]
    v = qkv[:, 2 * e:]

    # ---- all-head attention, batch folded into the token axis -------------------
    # Head split via aligned lane slices + a leading-axis stack (kept instead of a
    # rank-4 reshape/transpose for robust Mosaic lowering).  Result: (H, T, Dh)
    # with heads as the leading einsum batch dim -> one batched matmul pair
    # instead of 2*H*batch tiny dots and no explicit k.T transposes.
    def split_heads(t2d):
        return jnp.stack(
            [t2d[:, h * head_dim:(h + 1) * head_dim] for h in range(n_heads)],
            axis=0)

    qh, kh, vh = split_heads(q), split_heads(k), split_heads(v)   # (H, T, Dh) f32

    scale = 1.0 / math.sqrt(head_dim)
    s = jnp.einsum("hld,hmd->hlm", qh, kh,
                   preferred_element_type=jnp.float32) * scale    # (H, T, T)

    # Batch folded into T (row t belongs to batch t % n_batch): mask cross-batch
    # scores so the folded softmax equals the per-batch softmax exactly.
    row = lax.broadcasted_iota(jnp.int32, (t_tokens, t_tokens), 0)
    col = lax.broadcasted_iota(jnp.int32, (t_tokens, t_tokens), 1)
    same_batch = (row % n_batch) == (col % n_batch)
    s = s + jnp.where(same_batch, 0.0, NEG_INF)[None, :, :]

    s = s - jnp.max(s, axis=-1, keepdims=True)
    p = jnp.exp(s)
    p = p * pl.reciprocal(jnp.sum(p, axis=-1, keepdims=True), approx=True)

    a = jnp.einsum("hlm,hmd->hld", p, vh,
                   preferred_element_type=jnp.float32)            # (H, T, Dh)
    attn = jnp.concatenate([a[h] for h in range(n_heads)], axis=-1)  # (T, E)

    # ---- output projection -------------------------------------------------------
    attn = jnp.dot(attn.astype(MXU_DTYPE), wo_ref[...],
                   preferred_element_type=jnp.float32) + bo_ref[...]

    # ---- residual + LayerNorm1 ----------------------------------------------------
    h1 = _layer_norm(x + attn, g1_ref[...], be1_ref[...])

    # ---- feed-forward: Linear -> GELU -> Linear -----------------------------------
    ff = jnp.dot(h1.astype(MXU_DTYPE), w1_ref[...],
                 preferred_element_type=jnp.float32) + bf1_ref[...]
    ff = _gelu_exact(ff)
    ff = jnp.dot(ff.astype(MXU_DTYPE), w2_ref[...],
                 preferred_element_type=jnp.float32) + bf2_ref[...]

    # ---- residual + LayerNorm2 ----------------------------------------------------
    o_ref[...] = _layer_norm(h1 + ff, g2_ref[...], be2_ref[...])


def gpt2_decoder_layer(x_lne, params):
    """x_lne: (L, N, E) float32 (nn.MultiheadAttention default seq, batch, embed)."""
    (wqkv, bqkv, wo, bo, g1, be1, w1, bf1, w2, bf2, g2, be2) = params
    L, N, E = x_lne.shape
    x2d = x_lne.reshape(L * N, E)            # free reshape, no transpose: row = l*N + n

    # MXU operands in bf16; biases / LayerNorm params / element-wise math stay f32.
    wqkv, wo, w1, w2 = (w.astype(MXU_DTYPE) for w in (wqkv, wo, w1, w2))

    kernel = functools.partial(
        decoder_layer_kernel, n_batch=N, n_heads=N_HEADS, head_dim=HEAD_DIM)

    out2d = pl.pallas_call(
        kernel,
        out_shape=jax.ShapeDtypeStruct((L * N, E), jnp.float32),
        # No grid: the whole (L*N, E) slab + all weights fit VMEM comfortably at
        # this size, so everything runs in one invocation (no per-step overhead).
    )(x2d, wqkv, bqkv, wo, bo, g1, be1, w1, bf1, w2, bf2, g2, be2)

    return out2d.reshape(L, N, E)


def reference_jax(x_lne, params):
    """Pure-JAX reference mirroring the kernel's precision policy (bf16 matmul
    operands, f32 accumulation / element-wise); standard per-batch attention."""
    (wqkv, bqkv, wo, bo, g1, be1, w1, bf1, w2, bf2, g2, be2) = params
    L, N, E = x_lne.shape
    H, Dh = N_HEADS, HEAD_DIM
    x = x_lne.reshape(L * N, E)

    def mm(a, w):
        return jnp.dot(a.astype(MXU_DTYPE), w.astype(MXU_DTYPE),
                       preferred_element_type=jnp.float32)

    qkv = mm(x, wqkv) + bqkv
    q, k, v = qkv[:, :E], qkv[:, E:2 * E], qkv[:, 2 * E:]
    q = q.reshape(L, N, H, Dh)
    k = k.reshape(L, N, H, Dh)
    v = v.reshape(L, N, H, Dh)
    s = jnp.einsum("lnhd,mnhd->nhlm", q, k) / math.sqrt(Dh)
    p = jax.nn.softmax(s, axis=-1)
    a = jnp.einsum("nhlm,mnhd->lnhd", p, v).reshape(L * N, E)
    a = mm(a, wo) + bo

    def ln(h, g, b):
        mu = jnp.mean(h, -1, keepdims=True)
        var = jnp.mean((h - mu) ** 2, -1, keepdims=True)
        return (h - mu) * lax.rsqrt(var + LN_EPS) * g + b

    h1 = ln(x + a, g1, be1)
    ff = mm(_gelu_exact(mm(h1, w1) + bf1), w2) + bf2
    h2 = ln(h1 + ff, g2, be2)
    return h2.reshape(L, N, E)


def init_params(key):
    ks = jax.random.split(key, 6)
    std = 0.02
    E, F = D_MODEL, D_FF
    # Weights stored pre-transposed so the kernel computes x @ W + b; QKV fused.
    wqkv = jax.random.normal(ks[0], (E, 3 * E), jnp.float32) * std
    wo = jax.random.normal(ks[1], (E, E), jnp.float32) * std
    w1 = jax.random.normal(ks[2], (E, F), jnp.float32) * std
    w2 = jax.random.normal(ks[3], (F, E), jnp.float32) * std
    bqkv = jax.random.normal(ks[4], (1, 3 * E), jnp.float32) * std
    bo = jnp.zeros((1, E), jnp.float32)
    bf1 = jax.random.normal(ks[5], (1, F), jnp.float32) * std
    bf2 = jnp.zeros((1, E), jnp.float32)
    g1 = jnp.ones((1, E), jnp.float32)
    be1 = jnp.zeros((1, E), jnp.float32)
    g2 = jnp.ones((1, E), jnp.float32)
    be2 = jnp.zeros((1, E), jnp.float32)
    return (wqkv, bqkv, wo, bo, g1, be1, w1, bf1, w2, bf2, g2, be2)


if __name__ == "__main__":
    key = jax.random.PRNGKey(0)
    k_x, k_p = jax.random.split(key)
    # Input follows nn.MultiheadAttention default layout: (seq, batch, d_model).
    x = jax.random.normal(k_x, (SEQ, BATCH, D_MODEL), jnp.float32)
    params = init_params(k_p)

    out = jax.block_until_ready(gpt2_decoder_layer(x, params))
    ref = reference_jax(x, params)

    assert out.shape == (SEQ, BATCH, D_MODEL)
    # Only deviations from the reference: approx EUP reciprocal in the softmax
    # and MXU accumulation order -> well within 1e-2.
    assert jnp.allclose(out, ref, atol=1e-2, rtol=1e-2), "mismatch vs JAX reference"
    print("KERNEL_OK")
</pallas_src>

<mosaic_0001>
module attributes {stable_mosaic.version = 11 : i64} {
  func.func @decoder_layer_kernel(%arg0: memref<16x128xf32, #tpu.memory_space<vmem>>, %arg1: memref<128x384xbf16, #tpu.memory_space<vmem>>, %arg2: memref<1x384xf32, #tpu.memory_space<vmem>>, %arg3: memref<128x128xbf16, #tpu.memory_space<vmem>>, %arg4: memref<1x128xf32, #tpu.memory_space<vmem>>, %arg5: memref<1x128xf32, #tpu.memory_space<vmem>>, %arg6: memref<1x128xf32, #tpu.memory_space<vmem>>, %arg7: memref<128x512xbf16, #tpu.memory_space<vmem>>, %arg8: memref<1x512xf32, #tpu.memory_space<vmem>>, %arg9: memref<512x128xbf16, #tpu.memory_space<vmem>>, %arg10: memref<1x128xf32, #tpu.memory_space<vmem>>, %arg11: memref<1x128xf32, #tpu.memory_space<vmem>>, %arg12: memref<1x128xf32, #tpu.memory_space<vmem>>, %arg13: memref<16x128xf32, #tpu.memory_space<vmem>>) attributes {dimension_semantics = [], scalar_prefetch = 0 : i64, scratch_operands = 0 : i64, tpu.core_type = #tpu.core_type<tc>} {
    %c0 = arith.constant 0 : index
    %c0_0 = arith.constant 0 : index
    %0 = vector.load %arg0[%c0, %c0_0] : memref<16x128xf32, #tpu.memory_space<vmem>>, vector<16x128xf32>
    %1 = arith.truncf %0 : vector<16x128xf32> to vector<16x128xbf16>
    %c0_1 = arith.constant 0 : index
    %c0_2 = arith.constant 0 : index
    %2 = vector.load %arg1[%c0_1, %c0_2] : memref<128x384xbf16, #tpu.memory_space<vmem>>, vector<128x384xbf16>
    %cst = arith.constant dense<0.000000e+00> : vector<16x384xf32>
    %3 = tpu.matmul %1, %2, %cst {dimension_numbers = #tpu.dot_dimension_numbers<[1], [0], [0], [1], [0, 0, 1, 1], [], []>} : vector<16x128xbf16>, vector<128x384xbf16>, vector<16x384xf32> -> vector<16x384xf32>
    %c0_3 = arith.constant 0 : index
    %c0_4 = arith.constant 0 : index
    %4 = vector.load %arg2[%c0_3, %c0_4] : memref<1x384xf32, #tpu.memory_space<vmem>>, vector<1x384xf32>
    %5 = vector.broadcast %4 : vector<1x384xf32> to vector<16x384xf32>
    %6 = arith.addf %3, %5 : vector<16x384xf32>
    %7 = vector.extract_strided_slice %6 {offsets = [0, 0], sizes = [16, 128], strides = [1, 1]} : vector<16x384xf32> to vector<16x128xf32>
    %8 = vector.extract_strided_slice %6 {offsets = [0, 128], sizes = [16, 128], strides = [1, 1]} : vector<16x384xf32> to vector<16x128xf32>
    %9 = vector.extract_strided_slice %6 {offsets = [0, 256], sizes = [16, 128], strides = [1, 1]} : vector<16x384xf32> to vector<16x128xf32>
    %10 = vector.extract_strided_slice %7 {offsets = [0, 0], sizes = [16, 32], strides = [1, 1]} : vector<16x128xf32> to vector<16x32xf32>
    %11 = vector.extract_strided_slice %7 {offsets = [0, 32], sizes = [16, 32], strides = [1, 1]} : vector<16x128xf32> to vector<16x32xf32>
    %12 = vector.extract_strided_slice %7 {offsets = [0, 64], sizes = [16, 32], strides = [1, 1]} : vector<16x128xf32> to vector<16x32xf32>
    %13 = vector.extract_strided_slice %7 {offsets = [0, 96], sizes = [16, 32], strides = [1, 1]} : vector<16x128xf32> to vector<16x32xf32>
    %14 = vector.shape_cast %10 : vector<16x32xf32> to vector<1x16x32xf32>
    %15 = vector.shape_cast %11 : vector<16x32xf32> to vector<1x16x32xf32>
    %16 = vector.shape_cast %12 : vector<16x32xf32> to vector<1x16x32xf32>
    %17 = vector.shape_cast %13 : vector<16x32xf32> to vector<1x16x32xf32>
    %18 = tpu.concatenate %14, %15, %16, %17 in 0 : vector<1x16x32xf32>, vector<1x16x32xf32>, vector<1x16x32xf32>, vector<1x16x32xf32> -> vector<4x16x32xf32>
    %19 = vector.extract_strided_slice %8 {offsets = [0, 0], sizes = [16, 32], strides = [1, 1]} : vector<16x128xf32> to vector<16x32xf32>
    %20 = vector.extract_strided_slice %8 {offsets = [0, 32], sizes = [16, 32], strides = [1, 1]} : vector<16x128xf32> to vector<16x32xf32>
    %21 = vector.extract_strided_slice %8 {offsets = [0, 64], sizes = [16, 32], strides = [1, 1]} : vector<16x128xf32> to vector<16x32xf32>
    %22 = vector.extract_strided_slice %8 {offsets = [0, 96], sizes = [16, 32], strides = [1, 1]} : vector<16x128xf32> to vector<16x32xf32>
    %23 = vector.shape_cast %19 : vector<16x32xf32> to vector<1x16x32xf32>
    %24 = vector.shape_cast %20 : vector<16x32xf32> to vector<1x16x32xf32>
    %25 = vector.shape_cast %21 : vector<16x32xf32> to vector<1x16x32xf32>
    %26 = vector.shape_cast %22 : vector<16x32xf32> to vector<1x16x32xf32>
    %27 = tpu.concatenate %23, %24, %25, %26 in 0 : vector<1x16x32xf32>, vector<1x16x32xf32>, vector<1x16x32xf32>, vector<1x16x32xf32> -> vector<4x16x32xf32>
    %28 = vector.extract_strided_slice %9 {offsets = [0, 0], sizes = [16, 32], strides = [1, 1]} : vector<16x128xf32> to vector<16x32xf32>
    %29 = vector.extract_strided_slice %9 {offsets = [0, 32], sizes = [16, 32], strides = [1, 1]} : vector<16x128xf32> to vector<16x32xf32>
    %30 = vector.extract_strided_slice %9 {offsets = [0, 64], sizes = [16, 32], strides = [1, 1]} : vector<16x128xf32> to vector<16x32xf32>
    %31 = vector.extract_strided_slice %9 {offsets = [0, 96], sizes = [16, 32], strides = [1, 1]} : vector<16x128xf32> to vector<16x32xf32>
    %32 = vector.shape_cast %28 : vector<16x32xf32> to vector<1x16x32xf32>
    %33 = vector.shape_cast %29 : vector<16x32xf32> to vector<1x16x32xf32>
    %34 = vector.shape_cast %30 : vector<16x32xf32> to vector<1x16x32xf32>
    %35 = vector.shape_cast %31 : vector<16x32xf32> to vector<1x16x32xf32>
    %36 = tpu.concatenate %32, %33, %34, %35 in 0 : vector<1x16x32xf32>, vector<1x16x32xf32>, vector<1x16x32xf32>, vector<1x16x32xf32> -> vector<4x16x32xf32>
    "tpu.trace_start"() <{level = 10 : i32, message = "hld,hmd->hlm"}> : () -> ()
    %cst_5 = arith.constant dense<0.000000e+00> : vector<4x16x16xf32>
    %37 = tpu.matmul %18, %27, %cst_5 {dimension_numbers = #tpu.dot_dimension_numbers<[2], [2], [1], [1], [0, 0, 0, 1, 1, 1], [0], [0]>} : vector<4x16x32xf32>, vector<4x16x32xf32>, vector<4x16x16xf32> -> vector<4x16x16xf32>
    "tpu.trace_stop"() : () -> ()
    %cst_6 = arith.constant 0.176776692 : f32
    %38 = vector.broadcast %cst_6 : f32 to vector<4x16x16xf32>
    %39 = arith.mulf %37, %38 : vector<4x16x16xf32>
    %40 = tpu.iota {dimensions = array<i32: 0>} : vector<16x16xi32>
    %41 = tpu.iota {dimensions = array<i32: 1>} : vector<16x16xi32>
    %c2_i32 = arith.constant 2 : i32
    %c0_i32 = arith.constant 0 : i32
    %42 = arith.cmpi eq, %c2_i32, %c0_i32 : i32
    %c1_i32 = arith.constant 1 : i32
    %43 = arith.select %42, %c1_i32, %c2_i32 : i32
    %44 = vector.broadcast %43 : i32 to vector<16x16xi32>
    %45 = arith.remsi %40, %44 : vector<16x16xi32>
    %c0_i32_7 = arith.constant 0 : i32
    %46 = vector.broadcast %c0_i32_7 : i32 to vector<16x16xi32>
    %47 = arith.cmpi ne, %45, %46 : vector<16x16xi32>
    %c0_i32_8 = arith.constant 0 : i32
    %48 = vector.broadcast %c0_i32_8 : i32 to vector<16x16xi32>
    %49 = arith.cmpi slt, %45, %48 : vector<16x16xi32>
    %c0_i32_9 = arith.constant 0 : i32
    %50 = arith.cmpi slt, %43, %c0_i32_9 : i32
    %51 = vector.broadcast %50 : i1 to vector<16x16xi1>
    %52 = vector.broadcast %51 : vector<16x16xi1> to vector<16x16xi1>
    %53 = arith.xori %49, %52 : vector<16x16xi1>
    %54 = arith.andi %53, %47 : vector<16x16xi1>
    %55 = vector.broadcast %43 : i32 to vector<16x16xi32>
    %56 = arith.addi %45, %55 : vector<16x16xi32>
    %57 = arith.select %54, %56, %45 : vector<16x16xi1>, vector<16x16xi32>
    %c2_i32_10 = arith.constant 2 : i32
    %c0_i32_11 = arith.constant 0 : i32
    %58 = arith.cmpi eq, %c2_i32_10, %c0_i32_11 : i32
    %c1_i32_12 = arith.constant 1 : i32
    %59 = arith.select %58, %c1_i32_12, %c2_i32_10 : i32
    %60 = vector.broadcast %59 : i32 to vector<16x16xi32>
    %61 = arith.remsi %41, %60 : vector<16x16xi32>
    %c0_i32_13 = arith.constant 0 : i32
    %62 = vector.broadcast %c0_i32_13 : i32 to vector<16x16xi32>
    %63 = arith.cmpi ne, %61, %62 : vector<16x16xi32>
    %c0_i32_14 = arith.constant 0 : i32
    %64 = vector.broadcast %c0_i32_14 : i32 to vector<16x16xi32>
    %65 = arith.cmpi slt, %61, %64 : vector<16x16xi32>
    %c0_i32_15 = arith.constant 0 : i32
    %66 = arith.cmpi slt, %59, %c0_i32_15 : i32
    %67 = vector.broadcast %66 : i1 to vector<16x16xi1>
    %68 = vector.broadcast %67 : vector<16x16xi1> to vector<16x16xi1>
    %69 = arith.xori %65, %68 : vector<16x16xi1>
    %70 = arith.andi %69, %63 : vector<16x16xi1>
    %71 = vector.broadcast %59 : i32 to vector<16x16xi32>
    %72 = arith.addi %61, %71 : vector<16x16xi32>
    %73 = arith.select %70, %72, %61 : vector<16x16xi1>, vector<16x16xi32>
    %74 = arith.cmpi eq, %57, %73 : vector<16x16xi32>
    %cst_16 = arith.constant 0.000000e+00 : f32
    %cst_17 = arith.constant -1.000000e+30 : f32
    %75 = vector.broadcast %cst_16 : f32 to vector<16x16xf32>
    %76 = vector.broadcast %cst_17 : f32 to vector<16x16xf32>
    %77 = arith.select %74, %75, %76 : vector<16x16xi1>, vector<16x16xf32>
    %78 = vector.shape_cast %77 : vector<16x16xf32> to vector<1x16x16xf32>
    %79 = vector.broadcast %78 : vector<1x16x16xf32> to vector<4x16x16xf32>
    %80 = arith.addf %39, %79 : vector<4x16x16xf32>
    %cst_18 = arith.constant dense<0xFF800000> : vector<4x16xf32>
    %81 = vector.multi_reduction <maximumf>, %80, %cst_18 [2] : vector<4x16x16xf32> to vector<4x16xf32>
    %82 = vector.shape_cast %81 : vector<4x16xf32> to vector<4x16x1xf32>
    %83 = vector.broadcast %82 : vector<4x16x1xf32> to vector<4x16x16xf32>
    %84 = arith.subf %80, %83 : vector<4x16x16xf32>
    %85 = math.exp %84 : vector<4x16x16xf32>
    %cst_19 = arith.constant dense<0.000000e+00> : vector<4x16xf32>
    %86 = vector.multi_reduction <add>, %85, %cst_19 [2] : vector<4x16x16xf32> to vector<4x16xf32>
    %87 = vector.shape_cast %86 : vector<4x16xf32> to vector<4x16x1xf32>
    %88 = tpu.reciprocal %87 {approx = true} : vector<4x16x1xf32> -> vector<4x16x1xf32>
    %89 = vector.broadcast %88 : vector<4x16x1xf32> to vector<4x16x16xf32>
    %90 = arith.mulf %85, %89 : vector<4x16x16xf32>
    "tpu.trace_start"() <{level = 10 : i32, message = "hlm,hmd->hld"}> : () -> ()
    %cst_20 = arith.constant dense<0.000000e+00> : vector<4x16x32xf32>
    %91 = tpu.matmul %90, %36, %cst_20 {dimension_numbers = #tpu.dot_dimension_numbers<[2], [1], [1], [2], [0, 0, 0, 1, 1, 2], [0], [0]>} : vector<4x16x16xf32>, vector<4x16x32xf32>, vector<4x16x32xf32> -> vector<4x16x32xf32>
    "tpu.trace_stop"() : () -> ()
    %92 = vector.extract_strided_slice %91 {offsets = [0, 0, 0], sizes = [1, 16, 32], strides = [1, 1, 1]} : vector<4x16x32xf32> to vector<1x16x32xf32>
    %93 = vector.shape_cast %92 : vector<1x16x32xf32> to vector<16x32xf32>
    %94 = vector.extract_strided_slice %91 {offsets = [1, 0, 0], sizes = [1, 16, 32], strides = [1, 1, 1]} : vector<4x16x32xf32> to vector<1x16x32xf32>
    %95 = vector.shape_cast %94 : vector<1x16x32xf32> to vector<16x32xf32>
    %96 = vector.extract_strided_slice %91 {offsets = [2, 0, 0], sizes = [1, 16, 32], strides = [1, 1, 1]} : vector<4x16x32xf32> to vector<1x16x32xf32>
    %97 = vector.shape_cast %96 : vector<1x16x32xf32> to vector<16x32xf32>
    %98 = vector.extract_strided_slice %91 {offsets = [3, 0, 0], sizes = [1, 16, 32], strides = [1, 1, 1]} : vector<4x16x32xf32> to vector<1x16x32xf32>
    %99 = vector.shape_cast %98 : vector<1x16x32xf32> to vector<16x32xf32>
    %100 = tpu.concatenate %93, %95, %97, %99 in 1 : vector<16x32xf32>, vector<16x32xf32>, vector<16x32xf32>, vector<16x32xf32> -> vector<16x128xf32>
    %101 = arith.truncf %100 : vector<16x128xf32> to vector<16x128xbf16>
    %c0_21 = arith.constant 0 : index
    %c0_22 = arith.constant 0 : index
    %102 = vector.load %arg3[%c0_21, %c0_22] : memref<128x128xbf16, #tpu.memory_space<vmem>>, vector<128x128xbf16>
    %cst_23 = arith.constant dense<0.000000e+00> : vector<16x128xf32>
    %103 = tpu.matmul %101, %102, %cst_23 {dimension_numbers = #tpu.dot_dimension_numbers<[1], [0], [0], [1], [0, 0, 1, 1], [], []>} : vector<16x128xbf16>, vector<128x128xbf16>, vector<16x128xf32> -> vector<16x128xf32>
    %c0_24 = arith.constant 0 : index
    %c0_25 = arith.constant 0 : index
    %104 = vector.load %arg4[%c0_24, %c0_25] : memref<1x128xf32, #tpu.memory_space<vmem>>, vector<1x128xf32>
    %105 = vector.broadcast %104 : vector<1x128xf32> to vector<16x128xf32>
    %106 = arith.addf %103, %105 : vector<16x128xf32>
    %107 = arith.addf %0, %106 : vector<16x128xf32>
    %c0_26 = arith.constant 0 : index
    %c0_27 = arith.constant 0 : index
    %108 = vector.load %arg5[%c0_26, %c0_27] : memref<1x128xf32, #tpu.memory_space<vmem>>, vector<1x128xf32>
    %c0_28 = arith.constant 0 : index
    %c0_29 = arith.constant 0 : index
    %109 = vector.load %arg6[%c0_28, %c0_29] : memref<1x128xf32, #tpu.memory_space<vmem>>, vector<1x128xf32>
    %cst_30 = arith.constant dense<0.000000e+00> : vector<16xf32>
    %110 = vector.multi_reduction <add>, %107, %cst_30 [1] : vector<16x128xf32> to vector<16xf32>
    %111 = vector.shape_cast %110 : vector<16xf32> to vector<16x1xf32>
    %cst_31 = arith.constant 1.280000e+02 : f32
    %112 = vector.broadcast %cst_31 : f32 to vector<16x1xf32>
    %113 = arith.divf %111, %112 : vector<16x1xf32>
    %114 = vector.broadcast %113 : vector<16x1xf32> to vector<16x128xf32>
    %115 = arith.subf %107, %114 : vector<16x128xf32>
    %116 = arith.mulf %115, %115 : vector<16x128xf32>
    %cst_32 = arith.constant dense<0.000000e+00> : vector<16xf32>
    %117 = vector.multi_reduction <add>, %116, %cst_32 [1] : vector<16x128xf32> to vector<16xf32>
    %118 = vector.shape_cast %117 : vector<16xf32> to vector<16x1xf32>
    %cst_33 = arith.constant 1.280000e+02 : f32
    %119 = vector.broadcast %cst_33 : f32 to vector<16x1xf32>
    %120 = arith.divf %118, %119 : vector<16x1xf32>
    %121 = vector.broadcast %113 : vector<16x1xf32> to vector<16x128xf32>
    %122 = arith.subf %107, %121 : vector<16x128xf32>
    %cst_34 = arith.constant 9.99999974E-6 : f32
    %123 = vector.broadcast %cst_34 : f32 to vector<16x1xf32>
    %124 = arith.addf %120, %123 : vector<16x1xf32>
    %125 = math.rsqrt %124 : vector<16x1xf32>
    %126 = vector.broadcast %125 : vector<16x1xf32> to vector<16x128xf32>
    %127 = arith.mulf %122, %126 : vector<16x128xf32>
    %128 = vector.broadcast %108 : vector<1x128xf32> to vector<16x128xf32>
    %129 = arith.mulf %127, %128 : vector<16x128xf32>
    %130 = vector.broadcast %109 : vector<1x128xf32> to vector<16x128xf32>
    %131 = arith.addf %129, %130 : vector<16x128xf32>
    %132 = arith.truncf %131 : vector<16x128xf32> to vector<16x128xbf16>
    %c0_35 = arith.constant 0 : index
    %c0_36 = arith.constant 0 : index
    %133 = vector.load %arg7[%c0_35, %c0_36] : memref<128x512xbf16, #tpu.memory_space<vmem>>, vector<128x512xbf16>
    %cst_37 = arith.constant dense<0.000000e+00> : vector<16x512xf32>
    %134 = tpu.matmul %132, %133, %cst_37 {dimension_numbers = #tpu.dot_dimension_numbers<[1], [0], [0], [1], [0, 0, 1, 1], [], []>} : vector<16x128xbf16>, vector<128x512xbf16>, vector<16x512xf32> -> vector<16x512xf32>
    %c0_38 = arith.constant 0 : index
    %c0_39 = arith.constant 0 : index
    %135 = vector.load %arg8[%c0_38, %c0_39] : memref<1x512xf32, #tpu.memory_space<vmem>>, vector<1x512xf32>
    %136 = vector.broadcast %135 : vector<1x512xf32> to vector<16x512xf32>
    %137 = arith.addf %134, %136 : vector<16x512xf32>
    %cst_40 = arith.constant 5.000000e-01 : f32
    %138 = vector.broadcast %cst_40 : f32 to vector<16x512xf32>
    %139 = arith.mulf %138, %137 : vector<16x512xf32>
    %cst_41 = arith.constant 0.707106769 : f32
    %140 = vector.broadcast %cst_41 : f32 to vector<16x512xf32>
    %141 = arith.mulf %137, %140 : vector<16x512xf32>
    %142 = math.erf %141 : vector<16x512xf32>
    %cst_42 = arith.constant 1.000000e+00 : f32
    %143 = vector.broadcast %cst_42 : f32 to vector<16x512xf32>
    %144 = arith.addf %143, %142 : vector<16x512xf32>
    %145 = arith.mulf %139, %144 : vector<16x512xf32>
    %146 = arith.truncf %145 : vector<16x512xf32> to vector<16x512xbf16>
    %c0_43 = arith.constant 0 : index
    %c0_44 = arith.constant 0 : index
    %147 = vector.load %arg9[%c0_43, %c0_44] : memref<512x128xbf16, #tpu.memory_space<vmem>>, vector<512x128xbf16>
    %cst_45 = arith.constant dense<0.000000e+00> : vector<16x128xf32>
    %148 = tpu.matmul %146, %147, %cst_45 {dimension_numbers = #tpu.dot_dimension_numbers<[1], [0], [0], [1], [0, 0, 1, 1], [], []>} : vector<16x512xbf16>, vector<512x128xbf16>, vector<16x128xf32> -> vector<16x128xf32>
    %c0_46 = arith.constant 0 : index
    %c0_47 = arith.constant 0 : index
    %149 = vector.load %arg10[%c0_46, %c0_47] : memref<1x128xf32, #tpu.memory_space<vmem>>, vector<1x128xf32>
    %150 = vector.broadcast %149 : vector<1x128xf32> to vector<16x128xf32>
    %151 = arith.addf %148, %150 : vector<16x128xf32>
    %152 = arith.addf %131, %151 : vector<16x128xf32>
    %c0_48 = arith.constant 0 : index
    %c0_49 = arith.constant 0 : index
    %153 = vector.load %arg11[%c0_48, %c0_49] : memref<1x128xf32, #tpu.memory_space<vmem>>, vector<1x128xf32>
    %c0_50 = arith.constant 0 : index
    %c0_51 = arith.constant 0 : index
    %154 = vector.load %arg12[%c0_50, %c0_51] : memref<1x128xf32, #tpu.memory_space<vmem>>, vector<1x128xf32>
    %cst_52 = arith.constant dense<0.000000e+00> : vector<16xf32>
    %155 = vector.multi_reduction <add>, %152, %cst_52 [1] : vector<16x128xf32> to vector<16xf32>
    %156 = vector.shape_cast %155 : vector<16xf32> to vector<16x1xf32>
    %cst_53 = arith.constant 1.280000e+02 : f32
    %157 = vector.broadcast %cst_53 : f32 to vector<16x1xf32>
    %158 = arith.divf %156, %157 : vector<16x1xf32>
    %159 = vector.broadcast %158 : vector<16x1xf32> to vector<16x128xf32>
    %160 = arith.subf %152, %159 : vector<16x128xf32>
    %161 = arith.mulf %160, %160 : vector<16x128xf32>
    %cst_54 = arith.constant dense<0.000000e+00> : vector<16xf32>
    %162 = vector.multi_reduction <add>, %161, %cst_54 [1] : vector<16x128xf32> to vector<16xf32>
    %163 = vector.shape_cast %162 : vector<16xf32> to vector<16x1xf32>
    %cst_55 = arith.constant 1.280000e+02 : f32
    %164 = vector.broadcast %cst_55 : f32 to vector<16x1xf32>
    %165 = arith.divf %163, %164 : vector<16x1xf32>
    %166 = vector.broadcast %158 : vector<16x1xf32> to vector<16x128xf32>
    %167 = arith.subf %152, %166 : vector<16x128xf32>
    %cst_56 = arith.constant 9.99999974E-6 : f32
    %168 = vector.broadcast %cst_56 : f32 to vector<16x1xf32>
    %169 = arith.addf %165, %168 : vector<16x1xf32>
    %170 = math.rsqrt %169 : vector<16x1xf32>
    %171 = vector.broadcast %170 : vector<16x1xf32> to vector<16x128xf32>
    %172 = arith.mulf %167, %171 : vector<16x128xf32>
    %173 = vector.broadcast %153 : vector<1x128xf32> to vector<16x128xf32>
    %174 = arith.mulf %172, %173 : vector<16x128xf32>
    %175 = vector.broadcast %154 : vector<1x128xf32> to vector<16x128xf32>
    %176 = arith.addf %174, %175 : vector<16x128xf32>
    %c0_57 = arith.constant 0 : index
    %c0_58 = arith.constant 0 : index
    %177 = vector.load %arg13[%c0_57, %c0_58] : memref<16x128xf32, #tpu.memory_space<vmem>>, vector<16x128xf32>
    tpu.vector_store %arg13[%c0_57, %c0_58], %176 {strides = array<i32>} : memref<16x128xf32, #tpu.memory_space<vmem>>, vector<16x128xf32>,
    return
  }
}

</mosaic_0001>

<llo_original>
// kernel: tpu_custom_call.1
$region0: #{tpu_custom_call.1}
  #allocation0 [shape = 'u32[]', space=smem, size = 0x4, offset = 0x4, fixed_abs, tag = 'smem constant byte address 0x4 - core index']
  #allocation1 [shape = 'u32[72,128]{1,0:T(1,128)}', space=vmem, size = 0x9000, scoped, tag = 'internal scratch']
  %s0 = inlined_call_operand.hbm [shape: f32[16,128], index: 0, kind: input, shape index: {}]
  %s1 = inlined_call_operand.hbm [shape: bf16[128,384], index: 1, kind: input, shape index: {}]
  %s2 = inlined_call_operand.hbm [shape: f32[1,384], index: 2, kind: input, shape index: {}]
  %s3 = inlined_call_operand.hbm [shape: bf16[128,128], index: 3, kind: input, shape index: {}]
  %s4 = inlined_call_operand.vmem [shape: f32[1,128], index: 4, kind: input, shape index: {}]
  %s5 = inlined_call_operand.vmem [shape: f32[1,128], index: 5, kind: input, shape index: {}]
  %s6 = inlined_call_operand.vmem [shape: f32[1,128], index: 6, kind: input, shape index: {}]
  %s7 = inlined_call_operand.hbm [shape: bf16[128,512], index: 7, kind: input, shape index: {}]
  %s8 = inlined_call_operand.vmem [shape: f32[1,512], index: 8, kind: input, shape index: {}]
  %s9 = inlined_call_operand.hbm [shape: bf16[512,128], index: 9, kind: input, shape index: {}]
  %s10 = inlined_call_operand.vmem [shape: f32[1,128], index: 10, kind: input, shape index: {}]
  %s11 = inlined_call_operand.vmem [shape: f32[1,128], index: 11, kind: input, shape index: {}]
  %s12 = inlined_call_operand.vmem [shape: f32[1,128], index: 12, kind: input, shape index: {}]
  %s13 = inlined_call_operand.hbm [shape: f32[16,128], index: 13, kind: output, shape index: {}]
  %s14 = sld [smem:[#allocation0]]
  $region86: #{tpu_custom_call.1} parent=0
    _
  %s16 = ssub.s32 1, %s14
  %s17 = scalar_select 0, %s16, %s14
  $region1: #{tpu_custom_call.1} parent=0
    #allocation2 [shape = 'u8[8192]{0}', space=vmem, size = 0x2000, scoped, tag = 'input window, operand 0, single buffered']
    #allocation3 [shape = 's32[1]{0}', space=sflag, size = 0x4, scoped, tag = 'scoped memory for tpu_custom_call.1']
    #allocation4 [shape = 's32[1]{0}', space=sflag, size = 0x4, scoped, tag = 'scoped memory for tpu_custom_call.1']
    #allocation5 [shape = 'u8[98304]{0}', space=vmem, size = 0x18000, scoped, tag = 'input window, operand 1, single buffered']
    #allocation6 [shape = 's32[1]{0}', space=sflag, size = 0x4, scoped, tag = 'scoped memory for tpu_custom_call.1']
    #allocation7 [shape = 'u8[1536]{0}', space=vmem, size = 0x800, scoped, tag = 'input window, operand 2, single buffered']
    #allocation8 [shape = 'u8[32768]{0}', space=vmem, size = 0x8000, scoped, tag = 'input window, operand 3, single buffered']
    #allocation9 [shape = 's32[1]{0}', space=sflag, size = 0x4, scoped, tag = 'scoped memory for tpu_custom_call.1']
    #allocation10 [shape = 'u8[131072]{0}', space=vmem, size = 0x20000, scoped, tag = 'input window, operand 7, single buffered']
    #allocation11 [shape = 'u8[131072]{0}', space=vmem, size = 0x20000, scoped, tag = 'input window, operand 9, single buffered']
    #allocation12 [shape = 's32[1]{0}', space=sflag, size = 0x4, scoped, tag = 'scoped memory for tpu_custom_call.1']
    #allocation13 [shape = 'u8[8192]{0}', space=vmem, size = 0x2000, scoped, tag = 'output window, operand 0, single buffered']
    %18 = vsyncpa [#allocation3], 0
    %19 = vsyncpa [#allocation6], 0
    %20 = vsyncpa [#allocation9], 0
    %21 = vsyncpa [#allocation12], 0
    %22 = vsyncpa [#allocation4], 0
    // Predicated region
    $region2: #{tpu_custom_call.1} parent=1 // pred_check
      _
    $region3: #{tpu_custom_call.1} parent=1 // pred_check_branch
      %24 = sbr.rel (0) target = $region5
    $region4: #{tpu_custom_call.1} parent=1 // pred_region
      %26 = vsyncadd [#allocation3], 0
      %s27 = sshll.u32 %s0, 4
      %s28 = int_to_ptr.hbm [resolvable:$true] %s27
      %s29 = sshll.u32 [#allocation2], 4
      %s30 = int_to_ptr.vmem [resolvable:$true] %s29
      %35 = dma.hbm_to_vmem [thread:$0]  %s28, 256, %s30, [#allocation3], 128, 128, 8
    $region5: #{tpu_custom_call.1} parent=1 // pred_fallthru
      _
    // Predicated region
    $region6: #{tpu_custom_call.1} parent=1 // pred_check
      _
    $region7: #{tpu_custom_call.1} parent=1 // pred_check_branch
      %37 = sbr.rel (0) target = $region9
    $region8: #{tpu_custom_call.1} parent=1 // pred_region
      %39 = vsyncadd [#allocation6], 0
      %s40 = sshll.u32 %s1, 4
      %s41 = int_to_ptr.hbm [resolvable:$true] %s40
      %s42 = sshll.u32 [#allocation5], 4
      %s43 = int_to_ptr.vmem [resolvable:$true] %s42
      %48 = dma.hbm_to_vmem [thread:$0]  %s41, 3072, %s43, [#allocation6], 192, 192, 12
    $region9: #{tpu_custom_call.1} parent=1 // pred_fallthru
      _
    // Predicated region
    $region10: #{tpu_custom_call.1} parent=1 // pred_check
      _
    $region11: #{tpu_custom_call.1} parent=1 // pred_check_branch
      %50 = sbr.rel (0) target = $region13
    $region12: #{tpu_custom_call.1} parent=1 // pred_region
      %52 = vsyncadd [#allocation6], 0
      %s54 = sshll.u32 %s2, 4
      %s55 = int_to_ptr.hbm [resolvable:$true] %s54
      %s56 = sshll.u32 [#allocation7], 4
      %s57 = int_to_ptr.vmem [resolvable:$true] %s56
      %59 = dma.hbm_to_vmem [thread:$0]  %s55, 48, %s57, [#allocation6]
    $region13: #{tpu_custom_call.1} parent=1 // pred_fallthru
      _
    // Predicated region
    $region14: #{tpu_custom_call.1} parent=1 // pred_check
      _
    $region15: #{tpu_custom_call.1} parent=1 // pred_check_branch
      %61 = sbr.rel (0) target = $region17
    $region16: #{tpu_custom_call.1} parent=1 // pred_region
      %63 = vsyncadd [#allocation9], 0
      %s64 = sshll.u32 %s3, 4
      %s65 = int_to_ptr.hbm [resolvable:$true] %s64
      %s66 = sshll.u32 [#allocation8], 4
      %s67 = int_to_ptr.vmem [resolvable:$true] %s66
      %72 = dma.hbm_to_vmem [thread:$0]  %s65, 1024, %s67, [#allocation9], 64, 64, 4
    $region17: #{tpu_custom_call.1} parent=1 // pred_fallthru
      _
    // Predicated region
    $region18: #{tpu_custom_call.1} parent=1 // pred_check
      _
    $region19: #{tpu_custom_call.1} parent=1 // pred_check_branch
      %74 = sbr.rel (0) target = $region21
    $region20: #{tpu_custom_call.1} parent=1 // pred_region
      _
    $region21: #{tpu_custom_call.1} parent=1 // pred_fallthru
      _
    // Predicated region
    $region22: #{tpu_custom_call.1} parent=1 // pred_check
      _
    $region23: #{tpu_custom_call.1} parent=1 // pred_check_branch
      %76 = sbr.rel (0) target = $region25
    $region24: #{tpu_custom_call.1} parent=1 // pred_region
      _
    $region25: #{tpu_custom_call.1} parent=1 // pred_fallthru
      _
    // Predicated region
    $region26: #{tpu_custom_call.1} parent=1 // pred_check
      _
    $region27: #{tpu_custom_call.1} parent=1 // pred_check_branch
      %78 = sbr.rel (0) target = $region29
    $region28: #{tpu_custom_call.1} parent=1 // pred_region
      _
    $region29: #{tpu_custom_call.1} parent=1 // pred_fallthru
      _
    // Predicated region
    $region30: #{tpu_custom_call.1} parent=1 // pred_check
      _
    $region31: #{tpu_custom_call.1} parent=1 // pred_check_branch
      %80 = sbr.rel (0) target = $region33
    $region32: #{tpu_custom_call.1} parent=1 // pred_region
      %82 = vsyncadd [#allocation9], 0
      %s83 = sshll.u32 %s7, 4
      %s84 = int_to_ptr.hbm [resolvable:$true] %s83
      %s85 = sshll.u32 [#allocation10], 4
      %s86 = int_to_ptr.vmem [resolvable:$true] %s85
      %91 = dma.hbm_to_vmem [thread:$0]  %s84, 4096, %s86, [#allocation9], 256, 256, 16
    $region33: #{tpu_custom_call.1} parent=1 // pred_fallthru
      _
    // Predicated region
    $region34: #{tpu_custom_call.1} parent=1 // pred_check
      _
    $region35: #{tpu_custom_call.1} parent=1 // pred_check_branch
      %93 = sbr.rel (0) target = $region37
    $region36: #{tpu_custom_call.1} parent=1 // pred_region
      _
    $region37: #{tpu_custom_call.1} parent=1 // pred_fallthru
      _
    // Predicated region
    $region38: #{tpu_custom_call.1} parent=1 // pred_check
      _
    $region39: #{tpu_custom_call.1} parent=1 // pred_check_branch
      %95 = sbr.rel (0) target = $region41
    $region40: #{tpu_custom_call.1} parent=1 // pred_region
      %97 = vsyncadd [#allocation12], 0
      %s98 = sshll.u32 %s9, 4
      %s99 = int_to_ptr.hbm [resolvable:$true] %s98
      %s100 = sshll.u32 [#allocation11], 4
      %s101 = int_to_ptr.vmem [resolvable:$true] %s100
      %106 = dma.hbm_to_vmem [thread:$0]  %s99, 4096, %s101, [#allocation12], 64, 64, 4
    $region41: #{tpu_custom_call.1} parent=1 // pred_fallthru
      _
    // Predicated region
    $region42: #{tpu_custom_call.1} parent=1 // pred_check
      _
    $region43: #{tpu_custom_call.1} parent=1 // pred_check_branch
      %108 = sbr.rel (0) target = $region45
    $region44: #{tpu_custom_call.1} parent=1 // pred_region
      _
    $region45: #{tpu_custom_call.1} parent=1 // pred_fallthru
      _
    // Predicated region
    $region46: #{tpu_custom_call.1} parent=1 // pred_check
      _
    $region47: #{tpu_custom_call.1} parent=1 // pred_check_branch
      %110 = sbr.rel (0) target = $region49
    $region48: #{tpu_custom_call.1} parent=1 // pred_region
      _
    $region49: #{tpu_custom_call.1} parent=1 // pred_fallthru
      _
    // Predicated region
    $region50: #{tpu_custom_call.1} parent=1 // pred_check
      _
    $region51: #{tpu_custom_call.1} parent=1 // pred_check_branch
      %112 = sbr.rel (0) target = $region53
    $region52: #{tpu_custom_call.1} parent=1 // pred_region
      _
    $region53: #{tpu_custom_call.1} parent=1 // pred_fallthru
      _
    // Predicated region
    $region54: #{tpu_custom_call.1} parent=1 // pred_check
      _
    $region55: #{tpu_custom_call.1} parent=1 // pred_check_branch
      %114 = sbr.rel (0) target = $region57
    $region56: #{tpu_custom_call.1} parent=1 // pred_region
      %116 = dma.done [#allocation3], 256
    $region57: #{tpu_custom_call.1} parent=1 // pred_fallthru
      _
    // Predicated region
    $region58: #{tpu_custom_call.1} parent=1 // pred_check
      _
    $region59: #{tpu_custom_call.1} parent=1 // pred_check_branch
      %118 = sbr.rel (0) target = $region61
    $region60: #{tpu_custom_call.1} parent=1 // pred_region
      %120 = dma.done [#allocation6], 3072
    $region61: #{tpu_custom_call.1} parent=1 // pred_fallthru
      _
    // Predicated region
    $region62: #{tpu_custom_call.1} parent=1 // pred_check
      _
    $region63: #{tpu_custom_call.1} parent=1 // pred_check_branch
      %122 = sbr.rel (0) target = $region65
    $region64: #{tpu_custom_call.1} parent=1 // pred_region
      %124 = dma.done [#allocation6], 48
    $region65: #{tpu_custom_call.1} parent=1 // pred_fallthru
      _
    // Predicated region
    $region66: #{tpu_custom_call.1} parent=1 // pred_check
      _
    $region67: #{tpu_custom_call.1} parent=1 // pred_check_branch
      %126 = sbr.rel (0) target = $region69
    $region68: #{tpu_custom_call.1} parent=1 // pred_region
      %128 = dma.done [#allocation9], 1024
    $region69: #{tpu_custom_call.1} parent=1 // pred_fallthru
      _
    // Predicated region
    $region70: #{tpu_custom_call.1} parent=1 // pred_check
      _
    $region71: #{tpu_custom_call.1} parent=1 // pred_check_branch
      %130 = sbr.rel (0) target = $region73
    $region72: #{tpu_custom_call.1} parent=1 // pred_region
      %132 = dma.done [#allocation9], 4096
    $region73: #{tpu_custom_call.1} parent=1 // pred_fallthru
      _
    // Predicated region
    $region74: #{tpu_custom_call.1} parent=1 // pred_check
      _
    $region75: #{tpu_custom_call.1} parent=1 // pred_check_branch
      %134 = sbr.rel (0) target = $region77
    $region76: #{tpu_custom_call.1} parent=1 // pred_region
      %136 = dma.done [#allocation12], 4096
    $region77: #{tpu_custom_call.1} parent=1 // pred_fallthru
      _
    %v137 = vld [vmem:[#allocation2] sm:$0xff]
    %v138 = vld [vmem:[#allocation2 + $0x8] sm:$0xff]
    %v139 = vpack.c.bf16 %v138, %v137
    %v140 = vld [vmem:[#allocation5] sm:$0xff]
    %v141 = vld [vmem:[#allocation5 + $0x8] sm:$0xf]
    %v142 = vld [vmem:[#allocation5 + $0xc] sm:$0xff]
    %v143 = vld [vmem:[#allocation5 + $0x14] sm:$0xf]
    %v144 = vld [vmem:[#allocation5 + $0x18] sm:$0xff]
    %v145 = vld [vmem:[#allocation5 + $0x20] sm:$0xf]
    %v146 = vld [vmem:[#allocation5 + $0x24] sm:$0xff]
    %v147 = vld [vmem:[#allocation5 + $0x2c] sm:$0xf]
    %v148 = vld [vmem:[#allocation5 + $0x30] sm:$0xff]
    %v149 = vld [vmem:[#allocation5 + $0x38] sm:$0xf]
    %v150 = vld [vmem:[#allocation5 + $0x3c] sm:$0xff]
    %v151 = vld [vmem:[#allocation5 + $0x44] sm:$0xf]
    %v152 = vld [vmem:[#allocation5 + $0x48] sm:$0xff]
    %v153 = vld [vmem:[#allocation5 + $0x50] sm:$0xf]
    %v154 = vld [vmem:[#allocation5 + $0x54] sm:$0xff]
    %v155 = vld [vmem:[#allocation5 + $0x5c] sm:$0xf]
    %v156 = vld [vmem:[#allocation5 + $0x60] sm:$0xff]
    %v157 = vld [vmem:[#allocation5 + $0x68] sm:$0xf]
    %v158 = vld [vmem:[#allocation5 + $0x6c] sm:$0xff]
    %v159 = vld [vmem:[#allocation5 + $0x74] sm:$0xf]
    %v160 = vld [vmem:[#allocation5 + $0x78] sm:$0xff]
    %v161 = vld [vmem:[#allocation5 + $0x80] sm:$0xf]
    %v162 = vld [vmem:[#allocation5 + $0x84] sm:$0xff]
    %v163 = vld [vmem:[#allocation5 + $0x8c] sm:$0xf]
    %v164 = vld [vmem:[#allocation5 + $0x90] sm:$0xff]
    %v165 = vld [vmem:[#allocation5 + $0x98] sm:$0xf]
    %v166 = vld [vmem:[#allocation5 + $0x9c] sm:$0xff]
    %v167 = vld [vmem:[#allocation5 + $0xa4] sm:$0xf]
    %v168 = vld [vmem:[#allocation5 + $0xa8] sm:$0xff]
    %v169 = vld [vmem:[#allocation5 + $0xb0] sm:$0xf]
    %v170 = vld [vmem:[#allocation5 + $0xb4] sm:$0xff]
    %v171 = vld [vmem:[#allocation5 + $0xbc] sm:$0xf]
    %v172 = vld [vmem:[#allocation7] sm:$0x7]
    %v174 = vperm.slane %v172, 0
    %v175 = vperm.slane %v172, 1
    %v176 = vperm.slane %v172, 2
    %v212 = vunpack.c.l.b16 %v140
    %v213 = vunpack.c.h.b16 %v140
    %v214 = vunpack.c.l.b16 %v141
    %v215 = vunpack.c.l.b16 %v142
    %v216 = vunpack.c.h.b16 %v142
    %v217 = vunpack.c.l.b16 %v143
    %v218 = vunpack.c.l.b16 %v144
    %v219 = vunpack.c.h.b16 %v144
    %v220 = vunpack.c.l.b16 %v145
    %v221 = vunpack.c.l.b16 %v146
    %v222 = vunpack.c.h.b16 %v146
    %v223 = vunpack.c.l.b16 %v147
    %v224 = vunpack.c.l.b16 %v148
    %v225 = vunpack.c.h.b16 %v148
    %v226 = vunpack.c.l.b16 %v149
    %v227 = vunpack.c.l.b16 %v150
    %v228 = vunpack.c.h.b16 %v150
    %v229 = vunpack.c.l.b16 %v151
    %v230 = vunpack.c.l.b16 %v152
    %v231 = vunpack.c.h.b16 %v152
    %v232 = vunpack.c.l.b16 %v153
    %v233 = vunpack.c.l.b16 %v154
    %v234 = vunpack.c.h.b16 %v154
    %v235 = vunpack.c.l.b16 %v155
    %v236 = vunpack.c.l.b16 %v156
    %v237 = vunpack.c.h.b16 %v156
    %v238 = vunpack.c.l.b16 %v157
    %v239 = vunpack.c.l.b16 %v158
    %v240 = vunpack.c.h.b16 %v158
    %v241 = vunpack.c.l.b16 %v159
    %v242 = vunpack.c.l.b16 %v160
    %v243 = vunpack.c.h.b16 %v160
    %v244 = vunpack.c.l.b16 %v161
    %v245 = vunpack.c.l.b16 %v162
    %v246 = vunpack.c.h.b16 %v162
    %v247 = vunpack.c.l.b16 %v163
    %v248 = vunpack.c.l.b16 %v164
    %v249 = vunpack.c.h.b16 %v164
    %v250 = vunpack.c.l.b16 %v165
    %v251 = vunpack.c.l.b16 %v166
    %v252 = vunpack.c.h.b16 %v166
    %v253 = vunpack.c.l.b16 %v167
    %v254 = vunpack.c.l.b16 %v168
    %v255 = vunpack.c.h.b16 %v168
    %v256 = vunpack.c.l.b16 %v169
    %v257 = vunpack.c.l.b16 %v170
    %v258 = vunpack.c.h.b16 %v170
    %v259 = vunpack.c.l.b16 %v171
    %v260 = vpack.c.b16 %v215, %v212
    %v261 = vpack.c.b16 %v216, %v213
    %v262 = vpack.c.b16 %v217, %v214
    %v263 = vpack.c.b16 %v221, %v218
    %v264 = vpack.c.b16 %v222, %v219
    %v265 = vpack.c.b16 %v223, %v220
    %v266 = vpack.c.b16 %v227, %v224
    %v267 = vpack.c.b16 %v228, %v225
    %v268 = vpack.c.b16 %v229, %v226
    %v269 = vpack.c.b16 %v233, %v230
    %v270 = vpack.c.b16 %v234, %v231
    %v271 = vpack.c.b16 %v235, %v232
    %v272 = vpack.c.b16 %v239, %v236
    %v273 = vpack.c.b16 %v240, %v237
    %v274 = vpack.c.b16 %v241, %v238
    %v275 = vpack.c.b16 %v245, %v242
    %v276 = vpack.c.b16 %v246, %v243
    %v277 = vpack.c.b16 %v247, %v244
    %v278 = vpack.c.b16 %v251, %v248
    %v279 = vpack.c.b16 %v252, %v249
    %v280 = vpack.c.b16 %v253, %v250
    %v281 = vpack.c.b16 %v257, %v254
    %v282 = vpack.c.b16 %v258, %v255
    %v283 = vpack.c.b16 %v259, %v256
    %308 = vmatpush.bf16.msra.mxu0 %v281
    %309 = vmatpush.bf16.msra.mxu0 %v278
    %310 = vmatpush.bf16.msra.mxu0 %v275
    %311 = vmatpush.bf16.msra.mxu0 %v272
    %312 = vmatpush.bf16.msra.mxu0 %v269
    %313 = vmatpush.bf16.msra.mxu0 %v266
    %314 = vmatpush.bf16.msra.mxu0 %v263
    %315 = vmatpush.bf16.msra.mxu0 %v260
    %316 = vmatmul.bf16.gmra.mxu0 %v139
    %v317 = vpop.f32.mrf.mxu0
    %v318 = vadd.f32 %v174, %v317
    %v319 = vpop.f32.mrf.mxu0
    %v320 = vadd.f32 %v174, %v319
    %321 = vdwg.mxu0
    %322 = vmatpush.bf16.msra.mxu0 %v282
    %323 = vmatpush.bf16.msra.mxu0 %v279
    %324 = vmatpush.bf16.msra.mxu0 %v276
    %325 = vmatpush.bf16.msra.mxu0 %v273
    %326 = vmatpush.bf16.msra.mxu0 %v270
    %327 = vmatpush.bf16.msra.mxu0 %v267
    %328 = vmatpush.bf16.msra.mxu0 %v264
    %329 = vmatpush.bf16.msra.mxu0 %v261
    %330 = vmatmul.bf16.gmra.mxu0 %v139
    %v331 = vpop.f32.mrf.mxu0
    %v332 = vadd.f32 %v175, %v331
    %v333 = vpop.f32.mrf.mxu0
    %v334 = vadd.f32 %v175, %v333
    %335 = vdwg.mxu0
    %336 = vmatpush.bf16.msra.mxu0 %v283
    %337 = vmatpush.bf16.msra.mxu0 %v280
    %338 = vmatpush.bf16.msra.mxu0 %v277
    %339 = vmatpush.bf16.msra.mxu0 %v274
    %340 = vmatpush.bf16.msra.mxu0 %v271
    %341 = vmatpush.bf16.msra.mxu0 %v268
    %342 = vmatpush.bf16.msra.mxu0 %v265
    %343 = vmatpush.bf16.msra.mxu0 %v262
    %344 = vmatmul.bf16.gmra.mxu0 %v139
    %v345 = vpop.f32.mrf.mxu0
    %v346 = vadd.f32 %v176, %v345
    %v347 = vpop.f32.mrf.mxu0
    %v348 = vadd.f32 %v176, %v347
    %349 = vdwg.mxu0
    %352 = vrot.lane.b32.xlu0 %v318, 96
    %v353 = vpop.permute.xlu0 %352
    %354 = vrot.lane.b32.xlu0 %v320, 96
    %v355 = vpop.permute.xlu0 %354
    %356 = vrot.lane.b32.xlu0 %v318, 64
    %v357 = vpop.permute.xlu0 %356
    %358 = vrot.lane.b32.xlu0 %v320, 64
    %v359 = vpop.permute.xlu0 %358
    %360 = vrot.lane.b32.xlu0 %v318, 32
    %v361 = vpop.permute.xlu0 %360
    %362 = vrot.lane.b32.xlu0 %v320, 32
    %v363 = vpop.permute.xlu0 %362
    %366 = vrot.lane.b32.xlu0 %v332, 96
    %v367 = vpop.permute.xlu0 %366
    %368 = vrot.lane.b32.xlu0 %v334, 96
    %v369 = vpop.permute.xlu0 %368
    %370 = vrot.lane.b32.xlu0 %v332, 64
    %v371 = vpop.permute.xlu0 %370
    %372 = vrot.lane.b32.xlu0 %v334, 64
    %v373 = vpop.permute.xlu0 %372
    %374 = vrot.lane.b32.xlu0 %v332, 32
    %v375 = vpop.permute.xlu0 %374
    %376 = vrot.lane.b32.xlu0 %v334, 32
    %v377 = vpop.permute.xlu0 %376
    %380 = vrot.lane.b32.xlu0 %v346, 96
    %v381 = vpop.permute.xlu0 %380
    %382 = vrot.lane.b32.xlu0 %v348, 96
    %v383 = vpop.permute.xlu0 %382
    %386 = vrot.lane.b32.xlu0 %v346, 64
    %v387 = vpop.permute.xlu0 %386
    %388 = vrot.lane.b32.xlu0 %v348, 64
    %v389 = vpop.permute.xlu0 %388
    %392 = vrot.lane.b32.xlu0 %v346, 32
    %v393 = vpop.permute.xlu0 %392
    %394 = vrot.lane.b32.xlu0 %v348, 32
    %v395 = vpop.permute.xlu0 %394
    %vm398 = vcmask 261120
    %v399 = vsel %vm398, %v318, 0
    %v401 = vsel %vm398, %v320, 0
    %v403 = vsel %vm398, %v332, 0
    %v405 = vsel %vm398, %v334, 0
    %407 = vmatpush.xpose.msra.mxu0 0.0
    %408 = vmatpush.xpose.msra.mxu0 0.0
    %409 = vmatpush.xpose.msra.mxu0 0.0
    %410 = vmatpush.xpose.msra.mxu0 0.0
    %411 = vmatpush.xpose.msra.mxu0 0.0
    %412 = vmatpush.xpose.msra.mxu0 0.0
    %413 = vmatpush.xpose.msra.mxu0 0.0
    %414 = vmatpush.xpose.msra.mxu0 0.0
    %415 = vmatpush.xpose.msra.mxu0 0.0
    %416 = vmatpush.xpose.msra.mxu0 0.0
    %417 = vmatpush.xpose.msra.mxu0 0.0
    %418 = vmatpush.xpose.msra.mxu0 0.0
    %419 = vmatpush.xpose.msra.mxu0 0.0
    %420 = vmatpush.xpose.msra.mxu0 0.0
    %421 = vmatpush.xpose.msra.mxu0 %v405
    %422 = vmatpush.xpose.msra.mxu0 %v403
    %423 = vmatmul.f32.gmra.mxu0 %v399
    %v424 = vpop.f32.mrf.mxu0
    %v425 = vadd.f32 0.0, %v424
    %426 = vmatmul.f32.gmra.mxu0 %v401
    %v427 = vpop.f32.mrf.mxu0
    %v428 = vadd.f32 0.0, %v427
    %429 = vdwg.mxu0
    %v430 = vsel %vm398, %v353, 0
    %v432 = vsel %vm398, %v355, 0
    %v434 = vsel %vm398, %v367, 0
    %v436 = vsel %vm398, %v369, 0
    %438 = vmatpush.xpose.msra.mxu0 0.0
    %439 = vmatpush.xpose.msra.mxu0 0.0
    %440 = vmatpush.xpose.msra.mxu0 0.0
    %441 = vmatpush.xpose.msra.mxu0 0.0
    %442 = vmatpush.xpose.msra.mxu0 0.0
    %443 = vmatpush.xpose.msra.mxu0 0.0
    %444 = vmatpush.xpose.msra.mxu0 0.0
    %445 = vmatpush.xpose.msra.mxu0 0.0
    %446 = vmatpush.xpose.msra.mxu0 0.0
    %447 = vmatpush.xpose.msra.mxu0 0.0
    %448 = vmatpush.xpose.msra.mxu0 0.0
    %449 = vmatpush.xpose.msra.mxu0 0.0
    %450 = vmatpush.xpose.msra.mxu0 0.0
    %451 = vmatpush.xpose.msra.mxu0 0.0
    %452 = vmatpush.xpose.msra.mxu0 %v436
    %453 = vmatpush.xpose.msra.mxu0 %v434
    %454 = vmatmul.f32.gmra.mxu0 %v430
    %v455 = vpop.f32.mrf.mxu0
    %v456 = vadd.f32 0.0, %v455
    %457 = vmatmul.f32.gmra.mxu0 %v432
    %v458 = vpop.f32.mrf.mxu0
    %v459 = vadd.f32 0.0, %v458
    %460 = vdwg.mxu0
    %v461 = vsel %vm398, %v357, 0
    %v463 = vsel %vm398, %v359, 0
    %v465 = vsel %vm398, %v371, 0
    %v467 = vsel %vm398, %v373, 0
    %469 = vmatpush.xpose.msra.mxu0 0.0
    %470 = vmatpush.xpose.msra.mxu0 0.0
    %471 = vmatpush.xpose.msra.mxu0 0.0
    %472 = vmatpush.xpose.msra.mxu0 0.0
    %473 = vmatpush.xpose.msra.mxu0 0.0
    %474 = vmatpush.xpose.msra.mxu0 0.0
    %475 = vmatpush.xpose.msra.mxu0 0.0
    %476 = vmatpush.xpose.msra.mxu0 0.0
    %477 = vmatpush.xpose.msra.mxu0 0.0
    %478 = vmatpush.xpose.msra.mxu0 0.0
    %479 = vmatpush.xpose.msra.mxu0 0.0
    %480 = vmatpush.xpose.msra.mxu0 0.0
    %481 = vmatpush.xpose.msra.mxu0 0.0
    %482 = vmatpush.xpose.msra.mxu0 0.0
    %483 = vmatpush.xpose.msra.mxu0 %v467
    %484 = vmatpush.xpose.msra.mxu0 %v465
    %485 = vmatmul.f32.gmra.mxu0 %v461
    %v486 = vpop.f32.mrf.mxu0
    %v487 = vadd.f32 0.0, %v486
    %488 = vmatmul.f32.gmra.mxu0 %v463
    %v489 = vpop.f32.mrf.mxu0
    %v490 = vadd.f32 0.0, %v489
    %491 = vdwg.mxu0
    %v492 = vsel %vm398, %v361, 0
    %v494 = vsel %vm398, %v363, 0
    %v496 = vsel %vm398, %v375, 0
    %v498 = vsel %vm398, %v377, 0
    %500 = vmatpush.xpose.msra.mxu0 0.0
    %501 = vmatpush.xpose.msra.mxu0 0.0
    %502 = vmatpush.xpose.msra.mxu0 0.0
    %503 = vmatpush.xpose.msra.mxu0 0.0
    %504 = vmatpush.xpose.msra.mxu0 0.0
    %505 = vmatpush.xpose.msra.mxu0 0.0
    %506 = vmatpush.xpose.msra.mxu0 0.0
    %507 = vmatpush.xpose.msra.mxu0 0.0
    %508 = vmatpush.xpose.msra.mxu0 0.0
    %509 = vmatpush.xpose.msra.mxu0 0.0
    %510 = vmatpush.xpose.msra.mxu0 0.0
    %511 = vmatpush.xpose.msra.mxu0 0.0
    %512 = vmatpush.xpose.msra.mxu0 0.0
    %513 = vmatpush.xpose.msra.mxu0 0.0
    %514 = vmatpush.xpose.msra.mxu0 %v498
    %515 = vmatpush.xpose.msra.mxu0 %v496
    %516 = vmatmul.f32.gmra.mxu0 %v492
    %v517 = vpop.f32.mrf.mxu0
    %v518 = vadd.f32 0.0, %v517
    %519 = vmatmul.f32.gmra.mxu0 %v494
    %v520 = vpop.f32.mrf.mxu0
    %v521 = vadd.f32 0.0, %v520
    %522 = vdwg.mxu0
    %v523 = vmul.f32 %v425, 0.17677669
    %v524 = vmul.f32 %v428, 0.17677669
    %v525 = vmul.f32 %v456, 0.17677669
    %v526 = vmul.f32 %v459, 0.17677669
    %v527 = vmul.f32 %v487, 0.17677669
    %v528 = vmul.f32 %v490, 0.17677669
    %v529 = vmul.f32 %v518, 0.17677669
    %v530 = vmul.f32 %v521, 0.17677669
    %v531 = vlaneseq
    %v532 = vshrl.u32 %v531, 7
    %v533 = vadd.s32 %v532, 8
    %v534 = vlaneseq
    %v535 = vand.u32 %v534, 127
    %vm536 = vcmp.lt.s32.totalorder %v532, 0
    %v537 = vsub.s32 0, %v532
    %v538 = vsel %vm536, %v537, %v532
    %v539 = vshrl.u32 %v538, 1
    %v540 = vand.u32 %v538, 1
    %v541 = vsub.s32 0, %v540
    %v542 = vsel %vm536, %v541, %v540
    %vm543 = vcmp.lt.s32.totalorder %v533, 0
    %v544 = vsub.s32 0, %v533
    %v545 = vsel %vm543, %v544, %v533
    %v546 = vshrl.u32 %v545, 1
    %v547 = vand.u32 %v545, 1
    %v548 = vsub.s32 0, %v547
    %v549 = vsel %vm543, %v548, %v547
    %vm550 = vcmp.ne.s32.totalorder %v542, 0
    %vm551 = vcmp.ne.s32.totalorder %v549, 0
    %vm552 = vcmp.lt.s32.totalorder %v542, 0
    %vm553 = vcmp.lt.s32.totalorder %v549, 0
    %vm554 = vmand %vm552, %vm550
    %vm555 = vmand %vm553, %vm551
    %v556 = vadd.s32 %v542, 2
    %v557 = vadd.s32 %v549, 2
    %v558 = vsel %vm554, %v556, %v542
    %v559 = vsel %vm555, %v557, %v549
    %vm560 = vcmp.lt.s32.totalorder %v535, 0
    %v561 = vsub.s32 0, %v535
    %v562 = vsel %vm560, %v561, %v535
    %v563 = vshrl.u32 %v562, 1
    %v564 = vand.u32 %v562, 1
    %v565 = vsub.s32 0, %v564
    %v566 = vsel %vm560, %v565, %v564
    %vm567 = vcmp.ne.s32.totalorder %v566, 0
    %vm568 = vcmp.lt.s32.totalorder %v566, 0
    %vm569 = vmand %vm568, %vm567
    %v570 = vadd.s32 %v566, 2
    %v571 = vsel %vm569, %v570, %v566
    %vm572 = vcmp.eq.s32.totalorder %v558, %v571
    %vm573 = vcmp.eq.s32.totalorder %v559, %v571
    %v574 = vsel %vm572, 0.0, -1e+30
    %v575 = vsel %vm573, 0.0, -1e+30
    %v576 = vadd.f32 %v523, %v574
    %v577 = vadd.f32 %v524, %v575
    %v578 = vadd.f32 %v525, %v574
    %v579 = vadd.f32 %v526, %v575
    %v580 = vadd.f32 %v527, %v574
    %v581 = vadd.f32 %v528, %v575
    %v582 = vadd.f32 %v529, %v574
    %v583 = vadd.f32 %v530, %v575
    %vm584 = vcmask 130048
    %v585 = vsel %vm584, %v576, -inf
    %586 = vmax.xlane.f32.xlu0 %v585
    %v587 = vpop.xlane.xlu0 %586
    %v588 = vsel %vm584, %v577, -inf
    %589 = vmax.xlane.f32.xlu0 %v588
    %v590 = vpop.xlane.xlu0 %589
    %v591 = vsel %vm584, %v578, -inf
    %592 = vmax.xlane.f32.xlu0 %v591
    %v593 = vpop.xlane.xlu0 %592
    %v594 = vsel %vm584, %v579, -inf
    %595 = vmax.xlane.f32.xlu0 %v594
    %v596 = vpop.xlane.xlu0 %595
    %v597 = vsel %vm584, %v580, -inf
    %598 = vmax.xlane.f32.xlu0 %v597
    %v599 = vpop.xlane.xlu0 %598
    %v600 = vsel %vm584, %v581, -inf
    %601 = vmax.xlane.f32.xlu0 %v600
    %v602 = vpop.xlane.xlu0 %601
    %v603 = vsel %vm584, %v582, -inf
    %604 = vmax.xlane.f32.xlu0 %v603
    %v605 = vpop.xlane.xlu0 %604
    %v606 = vsel %vm584, %v583, -inf
    %607 = vmax.xlane.f32.xlu0 %v606
    %v608 = vpop.xlane.xlu0 %607
    %v609 = vsub.f32 %v576, %v587
    %v610 = vsub.f32 %v577, %v590
    %v611 = vsub.f32 %v578, %v593
    %v612 = vsub.f32 %v579, %v596
    %v613 = vsub.f32 %v580, %v599
    %v614 = vsub.f32 %v581, %v602
    %v615 = vsub.f32 %v582, %v605
    %v616 = vsub.f32 %v583, %v608
    %v617 = vmul.f32 %v609, 1.442695
    %v618 = vpow.pop %v617
    %v619 = vmul.f32 %v610, 1.442695
    %v620 = vpow.pop %v619
    %v621 = vmul.f32 %v611, 1.442695
    %v622 = vpow.pop %v621
    %v623 = vmul.f32 %v612, 1.442695
    %v624 = vpow.pop %v623
    %v625 = vmul.f32 %v613, 1.442695
    %v626 = vpow.pop %v625
    %v627 = vmul.f32 %v614, 1.442695
    %v628 = vpow.pop %v627
    %v629 = vmul.f32 %v615, 1.442695
    %v630 = vpow.pop %v629
    %v631 = vmul.f32 %v616, 1.442695
    %v632 = vpow.pop %v631
    %v633 = vsel %vm584, %v618, 0.0
    %634 = vadd.xlane.f32.xlu0 %v633
    %v635 = vpop.xlane.xlu0 %634
    %v636 = vsel %vm584, %v620, 0.0
    %637 = vadd.xlane.f32.xlu0 %v636
    %v638 = vpop.xlane.xlu0 %637
    %v639 = vsel %vm584, %v622, 0.0
    %640 = vadd.xlane.f32.xlu0 %v639
    %v641 = vpop.xlane.xlu0 %640
    %v642 = vsel %vm584, %v624, 0.0
    %643 = vadd.xlane.f32.xlu0 %v642
    %v644 = vpop.xlane.xlu0 %643
    %v645 = vsel %vm584, %v626, 0.0
    %646 = vadd.xlane.f32.xlu0 %v645
    %v647 = vpop.xlane.xlu0 %646
    %v648 = vsel %vm584, %v628, 0.0
    %649 = vadd.xlane.f32.xlu0 %v648
    %v650 = vpop.xlane.xlu0 %649
    %v651 = vsel %vm584, %v630, 0.0
    %652 = vadd.xlane.f32.xlu0 %v651
    %v653 = vpop.xlane.xlu0 %652
    %v654 = vsel %vm584, %v632, 0.0
    %655 = vadd.xlane.f32.xlu0 %v654
    %v656 = vpop.xlane.xlu0 %655
    %v657 = vrcp.pop %v635
    %v658 = vrcp.pop %v638
    %v659 = vrcp.pop %v641
    %v660 = vrcp.pop %v644
    %v661 = vrcp.pop %v647
    %v662 = vrcp.pop %v650
    %v663 = vrcp.pop %v653
    %v664 = vrcp.pop %v656
    %v665 = vmul.f32 %v618, %v657
    %v666 = vmul.f32 %v620, %v658
    %v667 = vmul.f32 %v622, %v659
    %v668 = vmul.f32 %v624, %v660
    %v669 = vmul.f32 %v626, %v661
    %v670 = vmul.f32 %v628, %v662
    %v671 = vmul.f32 %v630, %v663
    %v672 = vmul.f32 %v632, %v664
    %v674 = vsel %vm584, %v665, 0
    %v677 = vsel %vm584, %v666, 0
    %679 = vmatpush.msra.mxu0 0.0
    %680 = vmatpush.msra.mxu0 0.0
    %681 = vmatpush.msra.mxu0 0.0
    %682 = vmatpush.msra.mxu0 0.0
    %683 = vmatpush.msra.mxu0 0.0
    %684 = vmatpush.msra.mxu0 0.0
    %685 = vmatpush.msra.mxu0 0.0
    %686 = vmatpush.msra.mxu0 0.0
    %687 = vmatpush.msra.mxu0 0.0
    %688 = vmatpush.msra.mxu0 0.0
    %689 = vmatpush.msra.mxu0 0.0
    %690 = vmatpush.msra.mxu0 0.0
    %691 = vmatpush.msra.mxu0 0.0
    %692 = vmatpush.msra.mxu0 0.0
    %693 = vmatpush.msra.mxu0 %v348
    %694 = vmatpush.msra.mxu0 %v346
    %695 = vmatmul.f32.gmra.mxu0 %v674
    %v696 = vpop.f32.mrf.mxu0
    %v697 = vadd.f32 0.0, %v696
    %698 = vmatmul.f32.gmra.mxu0 %v677
    %v699 = vpop.f32.mrf.mxu0
    %v700 = vadd.f32 0.0, %v699
    %701 = vdwg.mxu0
    %v703 = vsel %vm584, %v667, 0
    %v706 = vsel %vm584, %v668, 0
    %708 = vmatpush.msra.mxu0 0.0
    %709 = vmatpush.msra.mxu0 0.0
    %710 = vmatpush.msra.mxu0 0.0
    %711 = vmatpush.msra.mxu0 0.0
    %712 = vmatpush.msra.mxu0 0.0
    %713 = vmatpush.msra.mxu0 0.0
    %714 = vmatpush.msra.mxu0 0.0
    %715 = vmatpush.msra.mxu0 0.0
    %716 = vmatpush.msra.mxu0 0.0
    %717 = vmatpush.msra.mxu0 0.0
    %718 = vmatpush.msra.mxu0 0.0
    %719 = vmatpush.msra.mxu0 0.0
    %720 = vmatpush.msra.mxu0 0.0
    %721 = vmatpush.msra.mxu0 0.0
    %722 = vmatpush.msra.mxu0 %v383
    %723 = vmatpush.msra.mxu0 %v381
    %724 = vmatmul.f32.gmra.mxu0 %v703
    %v725 = vpop.f32.mrf.mxu0
    %v726 = vadd.f32 0.0, %v725
    %727 = vmatmul.f32.gmra.mxu0 %v706
    %v728 = vpop.f32.mrf.mxu0
    %v729 = vadd.f32 0.0, %v728
    %730 = vdwg.mxu0
    %v732 = vsel %vm584, %v669, 0
    %v735 = vsel %vm584, %v670, 0
    %737 = vmatpush.msra.mxu0 0.0
    %738 = vmatpush.msra.mxu0 0.0
    %739 = vmatpush.msra.mxu0 0.0
    %740 = vmatpush.msra.mxu0 0.0
    %741 = vmatpush.msra.mxu0 0.0
    %742 = vmatpush.msra.mxu0 0.0
    %743 = vmatpush.msra.mxu0 0.0
    %744 = vmatpush.msra.mxu0 0.0
    %745 = vmatpush.msra.mxu0 0.0
    %746 = vmatpush.msra.mxu0 0.0
    %747 = vmatpush.msra.mxu0 0.0
    %748 = vmatpush.msra.mxu0 0.0
    %749 = vmatpush.msra.mxu0 0.0
    %750 = vmatpush.msra.mxu0 0.0
    %751 = vmatpush.msra.mxu0 %v389
    %752 = vmatpush.msra.mxu0 %v387
    %753 = vmatmul.f32.gmra.mxu0 %v732
    %v754 = vpop.f32.mrf.mxu0
    %v755 = vadd.f32 0.0, %v754
    %756 = vmatmul.f32.gmra.mxu0 %v735
    %v757 = vpop.f32.mrf.mxu0
    %v758 = vadd.f32 0.0, %v757
    %759 = vdwg.mxu0
    %v761 = vsel %vm584, %v671, 0
    %v764 = vsel %vm584, %v672, 0
    %766 = vmatpush.msra.mxu0 0.0
    %767 = vmatpush.msra.mxu0 0.0
    %768 = vmatpush.msra.mxu0 0.0
    %769 = vmatpush.msra.mxu0 0.0
    %770 = vmatpush.msra.mxu0 0.0
    %771 = vmatpush.msra.mxu0 0.0
    %772 = vmatpush.msra.mxu0 0.0
    %773 = vmatpush.msra.mxu0 0.0
    %774 = vmatpush.msra.mxu0 0.0
    %775 = vmatpush.msra.mxu0 0.0
    %776 = vmatpush.msra.mxu0 0.0
    %777 = vmatpush.msra.mxu0 0.0
    %778 = vmatpush.msra.mxu0 0.0
    %779 = vmatpush.msra.mxu0 0.0
    %780 = vmatpush.msra.mxu0 %v395
    %781 = vmatpush.msra.mxu0 %v393
    %782 = vmatmul.f32.gmra.mxu0 %v761
    %v783 = vpop.f32.mrf.mxu0
    %v784 = vadd.f32 0.0, %v783
    %785 = vmatmul.f32.gmra.mxu0 %v764
    %v786 = vpop.f32.mrf.mxu0
    %v787 = vadd.f32 0.0, %v786
    %788 = vdwg.mxu0
    %791 = vrot.lane.b32.xlu0 %v726, 32
    %v792 = vpop.permute.xlu0 %791
    %793 = vrot.lane.b32.xlu0 %v729, 32
    %v794 = vpop.permute.xlu0 %793
    %799 = vrot.lane.b32.xlu0 %v755, 64
    %v800 = vpop.permute.xlu0 %799
    %801 = vrot.lane.b32.xlu0 %v758, 64
    %v802 = vpop.permute.xlu0 %801
    %807 = vrot.lane.b32.xlu0 %v784, 96
    %v808 = vpop.permute.xlu0 %807
    %809 = vrot.lane.b32.xlu0 %v787, 96
    %v810 = vpop.permute.xlu0 %809
    %v813 = vsel %vm398, %v697, %v792
    %v814 = vsel %vm398, %v700, %v794
    %vm815 = vcmask 523264
    %v816 = vsel %vm815, %v813, %v800
    %v817 = vsel %vm815, %v814, %v802
    %vm818 = vcmask 785408
    %v819 = vsel %vm818, %v816, %v808
    %v820 = vsel %vm818, %v817, %v810
    %v821 = vpack.c.bf16 %v820, %v819
    %v822 = vld [vmem:[#allocation8] sm:$0xf]
    %v823 = vld [vmem:[#allocation8 + $0x4] sm:$0xf]
    %v824 = vld [vmem:[#allocation8 + $0x8] sm:$0xf]
    %v825 = vld [vmem:[#allocation8 + $0xc] sm:$0xf]
    %v826 = vld [vmem:[#allocation8 + $0x10] sm:$0xf]
    %v827 = vld [vmem:[#allocation8 + $0x14] sm:$0xf]
    %v828 = vld [vmem:[#allocation8 + $0x18] sm:$0xf]
    %v829 = vld [vmem:[#allocation8 + $0x1c] sm:$0xf]
    %v830 = vld [vmem:[#allocation8 + $0x20] sm:$0xf]
    %v831 = vld [vmem:[#allocation8 + $0x24] sm:$0xf]
    %v832 = vld [vmem:[#allocation8 + $0x28] sm:$0xf]
    %v833 = vld [vmem:[#allocation8 + $0x2c] sm:$0xf]
    %v834 = vld [vmem:[#allocation8 + $0x30] sm:$0xf]
    %v835 = vld [vmem:[#allocation8 + $0x34] sm:$0xf]
    %v836 = vld [vmem:[#allocation8 + $0x38] sm:$0xf]
    %v837 = vld [vmem:[#allocation8 + $0x3c] sm:$0xf]
    %v838 = vld [vmem:[%s4] sm:$0x1]
    %v840 = vperm.slane %v838, 0
    %v858 = vunpack.c.l.b16 %v822
    %v859 = vunpack.c.l.b16 %v823
    %v860 = vunpack.c.l.b16 %v824
    %v861 = vunpack.c.l.b16 %v825
    %v862 = vunpack.c.l.b16 %v826
    %v863 = vunpack.c.l.b16 %v827
    %v864 = vunpack.c.l.b16 %v828
    %v865 = vunpack.c.l.b16 %v829
    %v866 = vunpack.c.l.b16 %v830
    %v867 = vunpack.c.l.b16 %v831
    %v868 = vunpack.c.l.b16 %v832
    %v869 = vunpack.c.l.b16 %v833
    %v870 = vunpack.c.l.b16 %v834
    %v871 = vunpack.c.l.b16 %v835
    %v872 = vunpack.c.l.b16 %v836
    %v873 = vunpack.c.l.b16 %v837
    %v874 = vpack.c.b16 %v859, %v858
    %v875 = vpack.c.b16 %v861, %v860
    %v876 = vpack.c.b16 %v863, %v862
    %v877 = vpack.c.b16 %v865, %v864
    %v878 = vpack.c.b16 %v867, %v866
    %v879 = vpack.c.b16 %v869, %v868
    %v880 = vpack.c.b16 %v871, %v870
    %v881 = vpack.c.b16 %v873, %v872
    %890 = vmatpush.bf16.msra.mxu0 %v881
    %891 = vmatpush.bf16.msra.mxu0 %v880
    %892 = vmatpush.bf16.msra.mxu0 %v879
    %893 = vmatpush.bf16.msra.mxu0 %v878
    %894 = vmatpush.bf16.msra.mxu0 %v877
    %895 = vmatpush.bf16.msra.mxu0 %v876
    %896 = vmatpush.bf16.msra.mxu0 %v875
    %897 = vmatpush.bf16.msra.mxu0 %v874
    %898 = vmatmul.bf16.gmra.mxu0 %v821
    %v899 = vpop.f32.mrf.mxu0
    %v900 = vadd.f32 %v840, %v899
    %v901 = vpop.f32.mrf.mxu0
    %v902 = vadd.f32 %v840, %v901
    %903 = vdwg.mxu0
    %v904 = vadd.f32 %v137, %v900
    %v905 = vadd.f32 %v138, %v902
    %v906 = vld [vmem:[%s5] sm:$0x1]
    %v907 = vld [vmem:[%s6] sm:$0x1]
    %908 = vadd.xlane.f32.xlu0 %v904
    %v909 = vpop.xlane.xlu0 %908
    %910 = vadd.xlane.f32.xlu0 %v905
    %v911 = vpop.xlane.xlu0 %910
    %v912 = vrcp.pop 128.0
    %v913 = vmul.f32 128.0, %v912
    %v914 = vsub.f32 1.0, %v913
    %v915 = vmul.f32 %v912, %v914
    %v916 = vadd.f32 %v912, %v915
    %vm917 = vweird.f32 %v912
    %v918 = vsel %vm917, %v912, %v916
    %v919 = vmul.f32 %v909, %v918
    %v920 = vmul.f32 %v911, %v918
    %v921 = vsub.f32 %v904, %v919
    %v922 = vsub.f32 %v905, %v920
    %v923 = vmul.f32 %v921, %v921
    %v924 = vmul.f32 %v922, %v922
    %925 = vadd.xlane.f32.xlu0 %v923
    %v926 = vpop.xlane.xlu0 %925
    %927 = vadd.xlane.f32.xlu0 %v924
    %v928 = vpop.xlane.xlu0 %927
    %v929 = vmul.f32 %v926, %v918
    %v930 = vmul.f32 %v928, %v918
    %v931 = vadd.f32 %v929, 1e-05
    %v932 = vadd.f32 %v930, 1e-05
    %v933 = vrsqrt.pop %v931
    %v934 = vmul.f32 %v933, %v931
    %v935 = vmul.f32 %v934, %v933
    %v936 = vmul.f32 0.5, %v935
    %v937 = vsub.f32 1.5, %v936
    %v938 = vmul.f32 %v933, %v937
    %vm939 = vweird.f32 %v931
    %vm940 = vweird.f32 %v933
    %vm941 = vmor %vm939, %vm940
    %v942 = vsel %vm941, %v933, %v938
    %v943 = vrsqrt.pop %v932
    %v944 = vmul.f32 %v943, %v932
    %v945 = vmul.f32 %v944, %v943
    %v946 = vmul.f32 0.5, %v945
    %v947 = vsub.f32 1.5, %v946
    %v948 = vmul.f32 %v943, %v947
    %vm949 = vweird.f32 %v932
    %vm950 = vweird.f32 %v943
    %vm951 = vmor %vm949, %vm950
    %v952 = vsel %vm951, %v943, %v948
    %v953 = vmul.f32 %v921, %v942
    %v954 = vmul.f32 %v922, %v952
    %v956 = vperm.slane %v906, 0
    %v958 = vmul.f32 %v953, %v956
    %v959 = vmul.f32 %v954, %v956
    %v961 = vperm.slane %v907, 0
    %v963 = vadd.f32 %v958, %v961
    %v964 = vadd.f32 %v959, %v961
    %v965 = vpack.c.bf16 %v964, %v963
    %v966 = vld [vmem:[#allocation10] sm:$0xff]
    %v967 = vld [vmem:[#allocation10 + $0x8] sm:$0xff]
    %v968 = vld [vmem:[#allocation10 + $0x10] sm:$0xff]
    %v969 = vld [vmem:[#allocation10 + $0x18] sm:$0xff]
    %v970 = vld [vmem:[#allocation10 + $0x20] sm:$0xff]
    %v971 = vld [vmem:[#allocation10 + $0x28] sm:$0xff]
    %v972 = vld [vmem:[#allocation10 + $0x30] sm:$0xff]
    %v973 = vld [vmem:[#allocation10 + $0x38] sm:$0xff]
    %v974 = vld [vmem:[#allocation10 + $0x40] sm:$0xff]
    %v975 = vld [vmem:[#allocation10 + $0x48] sm:$0xff]
    %v976 = vld [vmem:[#allocation10 + $0x50] sm:$0xff]
    %v977 = vld [vmem:[#allocation10 + $0x58] sm:$0xff]
    %v978 = vld [vmem:[#allocation10 + $0x60] sm:$0xff]
    %v979 = vld [vmem:[#allocation10 + $0x68] sm:$0xff]
    %v980 = vld [vmem:[#allocation10 + $0x70] sm:$0xff]
    %v981 = vld [vmem:[#allocation10 + $0x78] sm:$0xff]
    %v982 = vld [vmem:[#allocation10 + $0x80] sm:$0xff]
    %v983 = vld [vmem:[#allocation10 + $0x88] sm:$0xff]
    %v984 = vld [vmem:[#allocation10 + $0x90] sm:$0xff]
    %v985 = vld [vmem:[#allocation10 + $0x98] sm:$0xff]
    %v986 = vld [vmem:[#allocation10 + $0xa0] sm:$0xff]
    %v987 = vld [vmem:[#allocation10 + $0xa8] sm:$0xff]
    %v988 = vld [vmem:[#allocation10 + $0xb0] sm:$0xff]
    %v989 = vld [vmem:[#allocation10 + $0xb8] sm:$0xff]
    %v990 = vld [vmem:[#allocation10 + $0xc0] sm:$0xff]
    %v991 = vld [vmem:[#allocation10 + $0xc8] sm:$0xff]
    %v992 = vld [vmem:[#allocation10 + $0xd0] sm:$0xff]
    %v993 = vld [vmem:[#allocation10 + $0xd8] sm:$0xff]
    %v994 = vld [vmem:[#allocation10 + $0xe0] sm:$0xff]
    %v995 = vld [vmem:[#allocation10 + $0xe8] sm:$0xff]
    %v996 = vld [vmem:[#allocation10 + $0xf0] sm:$0xff]
    %v997 = vld [vmem:[#allocation10 + $0xf8] sm:$0xff]
    %v998 = vld [vmem:[%s8] sm:$0xf]
    %v1000 = vperm.slane %v998, 0
    %v1001 = vperm.slane %v998, 1
    %v1002 = vperm.slane %v998, 2
    %v1003 = vperm.slane %v998, 3
    %v1040 = vunpack.c.l.b16 %v966
    %v1041 = vunpack.c.h.b16 %v966
    %v1042 = vunpack.c.l.b16 %v967
    %v1043 = vunpack.c.h.b16 %v967
    %v1044 = vunpack.c.l.b16 %v968
    %v1045 = vunpack.c.h.b16 %v968
    %v1046 = vunpack.c.l.b16 %v969
    %v1047 = vunpack.c.h.b16 %v969
    %v1048 = vunpack.c.l.b16 %v970
    %v1049 = vunpack.c.h.b16 %v970
    %v1050 = vunpack.c.l.b16 %v971
    %v1051 = vunpack.c.h.b16 %v971
    %v1052 = vunpack.c.l.b16 %v972
    %v1053 = vunpack.c.h.b16 %v972
    %v1054 = vunpack.c.l.b16 %v973
    %v1055 = vunpack.c.h.b16 %v973
    %v1056 = vunpack.c.l.b16 %v974
    %v1057 = vunpack.c.h.b16 %v974
    %v1058 = vunpack.c.l.b16 %v975
    %v1059 = vunpack.c.h.b16 %v975
    %v1060 = vunpack.c.l.b16 %v976
    %v1061 = vunpack.c.h.b16 %v976
    %v1062 = vunpack.c.l.b16 %v977
    %v1063 = vunpack.c.h.b16 %v977
    %v1064 = vunpack.c.l.b16 %v978
    %v1065 = vunpack.c.h.b16 %v978
    %v1066 = vunpack.c.l.b16 %v979
    %v1067 = vunpack.c.h.b16 %v979
    %v1068 = vunpack.c.l.b16 %v980
    %v1069 = vunpack.c.h.b16 %v980
    %v1070 = vunpack.c.l.b16 %v981
    %v1071 = vunpack.c.h.b16 %v981
    %v1072 = vunpack.c.l.b16 %v982
    %v1073 = vunpack.c.h.b16 %v982
    %v1074 = vunpack.c.l.b16 %v983
    %v1075 = vunpack.c.h.b16 %v983
    %v1076 = vunpack.c.l.b16 %v984
    %v1077 = vunpack.c.h.b16 %v984
    %v1078 = vunpack.c.l.b16 %v985
    %v1079 = vunpack.c.h.b16 %v985
    %v1080 = vunpack.c.l.b16 %v986
    %v1081 = vunpack.c.h.b16 %v986
    %v1082 = vunpack.c.l.b16 %v987
    %v1083 = vunpack.c.h.b16 %v987
    %v1084 = vunpack.c.l.b16 %v988
    %v1085 = vunpack.c.h.b16 %v988
    %v1086 = vunpack.c.l.b16 %v989
    %v1087 = vunpack.c.h.b16 %v989
    %v1088 = vunpack.c.l.b16 %v990
    %v1089 = vunpack.c.h.b16 %v990
    %v1090 = vunpack.c.l.b16 %v991
    %v1091 = vunpack.c.h.b16 %v991
    %v1092 = vunpack.c.l.b16 %v992
    %v1093 = vunpack.c.h.b16 %v992
    %v1094 = vunpack.c.l.b16 %v993
    %v1095 = vunpack.c.h.b16 %v993
    %v1096 = vunpack.c.l.b16 %v994
    %v1097 = vunpack.c.h.b16 %v994
    %v1098 = vunpack.c.l.b16 %v995
    %v1099 = vunpack.c.h.b16 %v995
    %v1100 = vunpack.c.l.b16 %v996
    %v1101 = vunpack.c.h.b16 %v996
    %v1102 = vunpack.c.l.b16 %v997
    %v1103 = vunpack.c.h.b16 %v997
    %v1104 = vpack.c.b16 %v1044, %v1040
    %v1105 = vpack.c.b16 %v1045, %v1041
    %v1106 = vpack.c.b16 %v1046, %v1042
    %v1107 = vpack.c.b16 %v1047, %v1043
    %v1108 = vpack.c.b16 %v1052, %v1048
    %v1109 = vpack.c.b16 %v1053, %v1049
    %v1110 = vpack.c.b16 %v1054, %v1050
    %v1111 = vpack.c.b16 %v1055, %v1051
    %v1112 = vpack.c.b16 %v1060, %v1056
    %v1113 = vpack.c.b16 %v1061, %v1057
    %v1114 = vpack.c.b16 %v1062, %v1058
    %v1115 = vpack.c.b16 %v1063, %v1059
    %v1116 = vpack.c.b16 %v1068, %v1064
    %v1117 = vpack.c.b16 %v1069, %v1065
    %v1118 = vpack.c.b16 %v1070, %v1066
    %v1119 = vpack.c.b16 %v1071, %v1067
    %v1120 = vpack.c.b16 %v1076, %v1072
    %v1121 = vpack.c.b16 %v1077, %v1073
    %v1122 = vpack.c.b16 %v1078, %v1074
    %v1123 = vpack.c.b16 %v1079, %v1075
    %v1124 = vpack.c.b16 %v1084, %v1080
    %v1125 = vpack.c.b16 %v1085, %v1081
    %v1126 = vpack.c.b16 %v1086, %v1082
    %v1127 = vpack.c.b16 %v1087, %v1083
    %v1128 = vpack.c.b16 %v1092, %v1088
    %v1129 = vpack.c.b16 %v1093, %v1089
    %v1130 = vpack.c.b16 %v1094, %v1090
    %v1131 = vpack.c.b16 %v1095, %v1091
    %v1132 = vpack.c.b16 %v1100, %v1096
    %v1133 = vpack.c.b16 %v1101, %v1097
    %v1134 = vpack.c.b16 %v1102, %v1098
    %v1135 = vpack.c.b16 %v1103, %v1099
    %1168 = vmatpush.bf16.msra.mxu0 %v1132
    %1169 = vmatpush.bf16.msra.mxu0 %v1128
    %1170 = vmatpush.bf16.msra.mxu0 %v1124
    %1171 = vmatpush.bf16.msra.mxu0 %v1120
    %1172 = vmatpush.bf16.msra.mxu0 %v1116
    %1173 = vmatpush.bf16.msra.mxu0 %v1112
    %1174 = vmatpush.bf16.msra.mxu0 %v1108
    %1175 = vmatpush.bf16.msra.mxu0 %v1104
    %1176 = vmatmul.bf16.gmra.mxu0 %v965
    %v1177 = vpop.f32.mrf.mxu0
    %v1178 = vadd.f32 %v1000, %v1177
    %v1179 = vpop.f32.mrf.mxu0
    %v1180 = vadd.f32 %v1000, %v1179
    %1181 = vdwg.mxu0
    %1182 = vmatpush.bf16.msra.mxu0 %v1133
    %1183 = vmatpush.bf16.msra.mxu0 %v1129
    %1184 = vmatpush.bf16.msra.mxu0 %v1125
    %1185 = vmatpush.bf16.msra.mxu0 %v1121
    %1186 = vmatpush.bf16.msra.mxu0 %v1117
    %1187 = vmatpush.bf16.msra.mxu0 %v1113
    %1188 = vmatpush.bf16.msra.mxu0 %v1109
    %1189 = vmatpush.bf16.msra.mxu0 %v1105
    %1190 = vmatmul.bf16.gmra.mxu0 %v965
    %v1191 = vpop.f32.mrf.mxu0
    %v1192 = vadd.f32 %v1001, %v1191
    %v1193 = vpop.f32.mrf.mxu0
    %v1194 = vadd.f32 %v1001, %v1193
    %1195 = vdwg.mxu0
    %1196 = vmatpush.bf16.msra.mxu0 %v1134
    %1197 = vmatpush.bf16.msra.mxu0 %v1130
    %1198 = vmatpush.bf16.msra.mxu0 %v1126
    %1199 = vmatpush.bf16.msra.mxu0 %v1122
    %1200 = vmatpush.bf16.msra.mxu0 %v1118
    %1201 = vmatpush.bf16.msra.mxu0 %v1114
    %1202 = vmatpush.bf16.msra.mxu0 %v1110
    %1203 = vmatpush.bf16.msra.mxu0 %v1106
    %1204 = vmatmul.bf16.gmra.mxu0 %v965
    %v1205 = vpop.f32.mrf.mxu0
    %v1206 = vadd.f32 %v1002, %v1205
    %v1207 = vpop.f32.mrf.mxu0
    %v1208 = vadd.f32 %v1002, %v1207
    %1209 = vdwg.mxu0
    %1210 = vmatpush.bf16.msra.mxu0 %v1135
    %1211 = vmatpush.bf16.msra.mxu0 %v1131
    %1212 = vmatpush.bf16.msra.mxu0 %v1127
    %1213 = vmatpush.bf16.msra.mxu0 %v1123
    %1214 = vmatpush.bf16.msra.mxu0 %v1119
    %1215 = vmatpush.bf16.msra.mxu0 %v1115
    %1216 = vmatpush.bf16.msra.mxu0 %v1111
    %1217 = vmatpush.bf16.msra.mxu0 %v1107
    %1218 = vmatmul.bf16.gmra.mxu0 %v965
    %v1219 = vpop.f32.mrf.mxu0
    %v1220 = vadd.f32 %v1003, %v1219
    %v1221 = vpop.f32.mrf.mxu0
    %v1222 = vadd.f32 %v1003, %v1221
    %1223 = vdwg.mxu0
    %v1224 = vmul.f32 %v1178, 0.5
    %v1225 = vmul.f32 %v1192, 0.5
    %v1226 = vmul.f32 %v1206, 0.5
    %v1227 = vmul.f32 %v1220, 0.5
    %v1228 = vmul.f32 %v1180, 0.5
    %v1229 = vmul.f32 %v1194, 0.5
    %v1230 = vmul.f32 %v1208, 0.5
    %v1231 = vmul.f32 %v1222, 0.5
    %v1232 = vmul.f32 %v1178, 0.70710677
    %v1233 = vmul.f32 %v1192, 0.70710677
    %v1234 = vmul.f32 %v1206, 0.70710677
    %v1235 = vmul.f32 %v1220, 0.70710677
    %v1236 = vmul.f32 %v1180, 0.70710677
    %v1237 = vmul.f32 %v1194, 0.70710677
    %v1238 = vmul.f32 %v1208, 0.70710677
    %v1239 = vmul.f32 %v1222, 0.70710677
    %v1240 = vmul.f32 %v1232, %v1232
    %v1241 = vmin.f32 16.0, %v1240
    %v1242 = vmul.f32 %v1241, 2.1237322e-06
    %v1243 = vadd.f32 %v1242, 0.00028619796
    %v1244 = vmul.f32 %v1241, %v1243
    %v1245 = vadd.f32 %v1244, 0.0036580483
    %v1246 = vmul.f32 %v1241, %v1245
    %v1247 = vadd.f32 %v1246, 0.05243302
    %v1248 = vmul.f32 %v1241, %v1247
    %v1249 = vadd.f32 %v1248, 0.18741608
    %v1250 = vmul.f32 %v1241, %v1249
    %v1251 = vadd.f32 %v1250, 1.1283791
    %v1252 = vmul.f32 %v1232, %v1251
    %v1253 = vmul.f32 %v1241, 3.8918573e-05
    %v1254 = vadd.f32 %v1253, 0.001143296
    %v1255 = vmul.f32 %v1241, %v1254
    %v1256 = vadd.f32 %v1255, 0.014752088
    %v1257 = vmul.f32 %v1241, %v1256
    %v1258 = vadd.f32 %v1257, 0.112945676
    %v1259 = vmul.f32 %v1241, %v1258
    %v1260 = vadd.f32 %v1259, 0.4994258
    %v1261 = vmul.f32 %v1241, %v1260
    %v1262 = vadd.f32 %v1261, 1.0
    %v1263 = vrcp.pop %v1262
    %v1264 = vmul.f32 %v1262, %v1263
    %v1265 = vsub.f32 1.0, %v1264
    %v1266 = vmul.f32 %v1263, %v1265
    %v1267 = vadd.f32 %v1263, %v1266
    %vm1268 = vweird.f32 %v1262
    %vm1269 = vweird.f32 %v1263
    %vm1270 = vmor %vm1268, %vm1269
    %v1271 = vsel %vm1270, %v1263, %v1267
    %v1272 = vand.u32 2147483647, %v1262
    %vm1273 = vcmp.eq.f32.partialorder %v1272, 8.507059e+37
    %v1274 = vand.u32 %v1262, 2147483648
    %v1275 = vor.u32 1.1754944e-38, %v1274
    %v1276 = vsel %vm1273, %v1275, %v1271
    %v1277 = vmul.f32 %v1252, %v1276
    %v1278 = vmin.f32 %v1277, 1.0
    %v1279 = vmax.f32 %v1278, -1.0
    %v1280 = vmul.f32 %v1233, %v1233
    %v1281 = vmin.f32 16.0, %v1280
    %v1282 = vmul.f32 %v1281, 2.1237322e-06
    %v1283 = vadd.f32 %v1282, 0.00028619796
    %v1284 = vmul.f32 %v1281, %v1283
    %v1285 = vadd.f32 %v1284, 0.0036580483
    %v1286 = vmul.f32 %v1281, %v1285
    %v1287 = vadd.f32 %v1286, 0.05243302
    %v1288 = vmul.f32 %v1281, %v1287
    %v1289 = vadd.f32 %v1288, 0.18741608
    %v1290 = vmul.f32 %v1281, %v1289
    %v1291 = vadd.f32 %v1290, 1.1283791
    %v1292 = vmul.f32 %v1233, %v1291
    %v1293 = vmul.f32 %v1281, 3.8918573e-05
    %v1294 = vadd.f32 %v1293, 0.001143296
    %v1295 = vmul.f32 %v1281, %v1294
    %v1296 = vadd.f32 %v1295, 0.014752088
    %v1297 = vmul.f32 %v1281, %v1296
    %v1298 = vadd.f32 %v1297, 0.112945676
    %v1299 = vmul.f32 %v1281, %v1298
    %v1300 = vadd.f32 %v1299, 0.4994258
    %v1301 = vmul.f32 %v1281, %v1300
    %v1302 = vadd.f32 %v1301, 1.0
    %v1303 = vrcp.pop %v1302
    %v1304 = vmul.f32 %v1302, %v1303
    %v1305 = vsub.f32 1.0, %v1304
    %v1306 = vmul.f32 %v1303, %v1305
    %v1307 = vadd.f32 %v1303, %v1306
    %vm1308 = vweird.f32 %v1302
    %vm1309 = vweird.f32 %v1303
    %vm1310 = vmor %vm1308, %vm1309
    %v1311 = vsel %vm1310, %v1303, %v1307
    %v1312 = vand.u32 2147483647, %v1302
    %vm1313 = vcmp.eq.f32.partialorder %v1312, 8.507059e+37
    %v1314 = vand.u32 %v1302, 2147483648
    %v1315 = vor.u32 1.1754944e-38, %v1314
    %v1316 = vsel %vm1313, %v1315, %v1311
    %v1317 = vmul.f32 %v1292, %v1316
    %v1318 = vmin.f32 %v1317, 1.0
    %v1319 = vmax.f32 %v1318, -1.0
    %v1320 = vmul.f32 %v1234, %v1234
    %v1321 = vmin.f32 16.0, %v1320
    %v1322 = vmul.f32 %v1321, 2.1237322e-06
    %v1323 = vadd.f32 %v1322, 0.00028619796
    %v1324 = vmul.f32 %v1321, %v1323
    %v1325 = vadd.f32 %v1324, 0.0036580483
    %v1326 = vmul.f32 %v1321, %v1325
    %v1327 = vadd.f32 %v1326, 0.05243302
    %v1328 = vmul.f32 %v1321, %v1327
    %v1329 = vadd.f32 %v1328, 0.18741608
    %v1330 = vmul.f32 %v1321, %v1329
    %v1331 = vadd.f32 %v1330, 1.1283791
    %v1332 = vmul.f32 %v1234, %v1331
    %v1333 = vmul.f32 %v1321, 3.8918573e-05
    %v1334 = vadd.f32 %v1333, 0.001143296
    %v1335 = vmul.f32 %v1321, %v1334
    %v1336 = vadd.f32 %v1335, 0.014752088
    %v1337 = vmul.f32 %v1321, %v1336
    %v1338 = vadd.f32 %v1337, 0.112945676
    %v1339 = vmul.f32 %v1321, %v1338
    %v1340 = vadd.f32 %v1339, 0.4994258
    %v1341 = vmul.f32 %v1321, %v1340
    %v1342 = vadd.f32 %v1341, 1.0
    %v1343 = vrcp.pop %v1342
    %v1344 = vmul.f32 %v1342, %v1343
    %v1345 = vsub.f32 1.0, %v1344
    %v1346 = vmul.f32 %v1343, %v1345
    %v1347 = vadd.f32 %v1343, %v1346
    %vm1348 = vweird.f32 %v1342
    %vm1349 = vweird.f32 %v1343
    %vm1350 = vmor %vm1348, %vm1349
    %v1351 = vsel %vm1350, %v1343, %v1347
    %v1352 = vand.u32 2147483647, %v1342
    %vm1353 = vcmp.eq.f32.partialorder %v1352, 8.507059e+37
    %v1354 = vand.u32 %v1342, 2147483648
    %v1355 = vor.u32 1.1754944e-38, %v1354
    %v1356 = vsel %vm1353, %v1355, %v1351
    %v1357 = vmul.f32 %v1332, %v1356
    %v1358 = vmin.f32 %v1357, 1.0
    %v1359 = vmax.f32 %v1358, -1.0
    %v1360 = vmul.f32 %v1235, %v1235
    %v1361 = vmin.f32 16.0, %v1360
    %v1362 = vmul.f32 %v1361, 2.1237322e-06
    %v1363 = vadd.f32 %v1362, 0.00028619796
    %v1364 = vmul.f32 %v1361, %v1363
    %v1365 = vadd.f32 %v1364, 0.0036580483
    %v1366 = vmul.f32 %v1361, %v1365
    %v1367 = vadd.f32 %v1366, 0.05243302
    %v1368 = vmul.f32 %v1361, %v1367
    %v1369 = vadd.f32 %v1368, 0.18741608
    %v1370 = vmul.f32 %v1361, %v1369
    %v1371 = vadd.f32 %v1370, 1.1283791
    %v1372 = vmul.f32 %v1235, %v1371
    %v1373 = vmul.f32 %v1361, 3.8918573e-05
    %v1374 = vadd.f32 %v1373, 0.001143296
    %v1375 = vmul.f32 %v1361, %v1374
    %v1376 = vadd.f32 %v1375, 0.014752088
    %v1377 = vmul.f32 %v1361, %v1376
    %v1378 = vadd.f32 %v1377, 0.112945676
    %v1379 = vmul.f32 %v1361, %v1378
    %v1380 = vadd.f32 %v1379, 0.4994258
    %v1381 = vmul.f32 %v1361, %v1380
    %v1382 = vadd.f32 %v1381, 1.0
    %v1383 = vrcp.pop %v1382
    %v1384 = vmul.f32 %v1382, %v1383
    %v1385 = vsub.f32 1.0, %v1384
    %v1386 = vmul.f32 %v1383, %v1385
    %v1387 = vadd.f32 %v1383, %v1386
    %vm1388 = vweird.f32 %v1382
    %vm1389 = vweird.f32 %v1383
    %vm1390 = vmor %vm1388, %vm1389
    %v1391 = vsel %vm1390, %v1383, %v1387
    %v1392 = vand.u32 2147483647, %v1382
    %vm1393 = vcmp.eq.f32.partialorder %v1392, 8.507059e+37
    %v1394 = vand.u32 %v1382, 2147483648
    %v1395 = vor.u32 1.1754944e-38, %v1394
    %v1396 = vsel %vm1393, %v1395, %v1391
    %v1397 = vmul.f32 %v1372, %v1396
    %v1398 = vmin.f32 %v1397, 1.0
    %v1399 = vmax.f32 %v1398, -1.0
    %v1400 = vmul.f32 %v1236, %v1236
    %v1401 = vmin.f32 16.0, %v1400
    %v1402 = vmul.f32 %v1401, 2.1237322e-06
    %v1403 = vadd.f32 %v1402, 0.00028619796
    %v1404 = vmul.f32 %v1401, %v1403
    %v1405 = vadd.f32 %v1404, 0.0036580483
    %v1406 = vmul.f32 %v1401, %v1405
    %v1407 = vadd.f32 %v1406, 0.05243302
    %v1408 = vmul.f32 %v1401, %v1407
    %v1409 = vadd.f32 %v1408, 0.18741608
    %v1410 = vmul.f32 %v1401, %v1409
    %v1411 = vadd.f32 %v1410, 1.1283791
    %v1412 = vmul.f32 %v1236, %v1411
    %v1413 = vmul.f32 %v1401, 3.8918573e-05
    %v1414 = vadd.f32 %v1413, 0.001143296
    %v1415 = vmul.f32 %v1401, %v1414
    %v1416 = vadd.f32 %v1415, 0.014752088
    %v1417 = vmul.f32 %v1401, %v1416
    %v1418 = vadd.f32 %v1417, 0.112945676
    %v1419 = vmul.f32 %v1401, %v1418
    %v1420 = vadd.f32 %v1419, 0.4994258
    %v1421 = vmul.f32 %v1401, %v1420
    %v1422 = vadd.f32 %v1421, 1.0
    %v1423 = vrcp.pop %v1422
    %v1424 = vmul.f32 %v1422, %v1423
    %v1425 = vsub.f32 1.0, %v1424
    %v1426 = vmul.f32 %v1423, %v1425
    %v1427 = vadd.f32 %v1423, %v1426
    %vm1428 = vweird.f32 %v1422
    %vm1429 = vweird.f32 %v1423
    %vm1430 = vmor %vm1428, %vm1429
    %v1431 = vsel %vm1430, %v1423, %v1427
    %v1432 = vand.u32 2147483647, %v1422
    %vm1433 = vcmp.eq.f32.partialorder %v1432, 8.507059e+37
    %v1434 = vand.u32 %v1422, 2147483648
    %v1435 = vor.u32 1.1754944e-38, %v1434
    %v1436 = vsel %vm1433, %v1435, %v1431
    %v1437 = vmul.f32 %v1412, %v1436
    %v1438 = vmin.f32 %v1437, 1.0
    %v1439 = vmax.f32 %v1438, -1.0
    %v1440 = vmul.f32 %v1237, %v1237
    %v1441 = vmin.f32 16.0, %v1440
    %v1442 = vmul.f32 %v1441, 2.1237322e-06
    %v1443 = vadd.f32 %v1442, 0.00028619796
    %v1444 = vmul.f32 %v1441, %v1443
    %v1445 = vadd.f32 %v1444, 0.0036580483
    %v1446 = vmul.f32 %v1441, %v1445
    %v1447 = vadd.f32 %v1446, 0.05243302
    %v1448 = vmul.f32 %v1441, %v1447
    %v1449 = vadd.f32 %v1448, 0.18741608
    %v1450 = vmul.f32 %v1441, %v1449
    %v1451 = vadd.f32 %v1450, 1.1283791
    %v1452 = vmul.f32 %v1237, %v1451
    %v1453 = vmul.f32 %v1441, 3.8918573e-05
    %v1454 = vadd.f32 %v1453, 0.001143296
    %v1455 = vmul.f32 %v1441, %v1454
    %v1456 = vadd.f32 %v1455, 0.014752088
    %v1457 = vmul.f32 %v1441, %v1456
    %v1458 = vadd.f32 %v1457, 0.112945676
    %v1459 = vmul.f32 %v1441, %v1458
    %v1460 = vadd.f32 %v1459, 0.4994258
    %v1461 = vmul.f32 %v1441, %v1460
    %v1462 = vadd.f32 %v1461, 1.0
    %v1463 = vrcp.pop %v1462
    %v1464 = vmul.f32 %v1462, %v1463
    %v1465 = vsub.f32 1.0, %v1464
    %v1466 = vmul.f32 %v1463, %v1465
    %v1467 = vadd.f32 %v1463, %v1466
    %vm1468 = vweird.f32 %v1462
    %vm1469 = vweird.f32 %v1463
    %vm1470 = vmor %vm1468, %vm1469
    %v1471 = vsel %vm1470, %v1463, %v1467
    %v1472 = vand.u32 2147483647, %v1462
    %vm1473 = vcmp.eq.f32.partialorder %v1472, 8.507059e+37
    %v1474 = vand.u32 %v1462, 2147483648
    %v1475 = vor.u32 1.1754944e-38, %v1474
    %v1476 = vsel %vm1473, %v1475, %v1471
    %v1477 = vmul.f32 %v1452, %v1476
    %v1478 = vmin.f32 %v1477, 1.0
    %v1479 = vmax.f32 %v1478, -1.0
    %v1480 = vmul.f32 %v1238, %v1238
    %v1481 = vmin.f32 16.0, %v1480
    %v1482 = vmul.f32 %v1481, 2.1237322e-06
    %v1483 = vadd.f32 %v1482, 0.00028619796
    %v1484 = vmul.f32 %v1481, %v1483
    %v1485 = vadd.f32 %v1484, 0.0036580483
    %v1486 = vmul.f32 %v1481, %v1485
    %v1487 = vadd.f32 %v1486, 0.05243302
    %v1488 = vmul.f32 %v1481, %v1487
    %v1489 = vadd.f32 %v1488, 0.18741608
    %v1490 = vmul.f32 %v1481, %v1489
    %v1491 = vadd.f32 %v1490, 1.1283791
    %v1492 = vmul.f32 %v1238, %v1491
    %v1493 = vmul.f32 %v1481, 3.8918573e-05
    %v1494 = vadd.f32 %v1493, 0.001143296
    %v1495 = vmul.f32 %v1481, %v1494
    %v1496 = vadd.f32 %v1495, 0.014752088
    %v1497 = vmul.f32 %v1481, %v1496
    %v1498 = vadd.f32 %v1497, 0.112945676
    %v1499 = vmul.f32 %v1481, %v1498
    %v1500 = vadd.f32 %v1499, 0.4994258
    %v1501 = vmul.f32 %v1481, %v1500
    %v1502 = vadd.f32 %v1501, 1.0
    %v1503 = vrcp.pop %v1502
    %v1504 = vmul.f32 %v1502, %v1503
    %v1505 = vsub.f32 1.0, %v1504
    %v1506 = vmul.f32 %v1503, %v1505
    %v1507 = vadd.f32 %v1503, %v1506
    %vm1508 = vweird.f32 %v1502
    %vm1509 = vweird.f32 %v1503
    %vm1510 = vmor %vm1508, %vm1509
    %v1511 = vsel %vm1510, %v1503, %v1507
    %v1512 = vand.u32 2147483647, %v1502
    %vm1513 = vcmp.eq.f32.partialorder %v1512, 8.507059e+37
    %v1514 = vand.u32 %v1502, 2147483648
    %v1515 = vor.u32 1.1754944e-38, %v1514
    %v1516 = vsel %vm1513, %v1515, %v1511
    %v1517 = vmul.f32 %v1492, %v1516
    %v1518 = vmin.f32 %v1517, 1.0
    %v1519 = vmax.f32 %v1518, -1.0
    %v1520 = vmul.f32 %v1239, %v1239
    %v1521 = vmin.f32 16.0, %v1520
    %v1522 = vmul.f32 %v1521, 2.1237322e-06
    %v1523 = vadd.f32 %v1522, 0.00028619796
    %v1524 = vmul.f32 %v1521, %v1523
    %v1525 = vadd.f32 %v1524, 0.0036580483
    %v1526 = vmul.f32 %v1521, %v1525
    %v1527 = vadd.f32 %v1526, 0.05243302
    %v1528 = vmul.f32 %v1521, %v1527
    %v1529 = vadd.f32 %v1528, 0.18741608
    %v1530 = vmul.f32 %v1521, %v1529
    %v1531 = vadd.f32 %v1530, 1.1283791
    %v1532 = vmul.f32 %v1239, %v1531
    %v1533 = vmul.f32 %v1521, 3.8918573e-05
    %v1534 = vadd.f32 %v1533, 0.001143296
    %v1535 = vmul.f32 %v1521, %v1534
    %v1536 = vadd.f32 %v1535, 0.014752088
    %v1537 = vmul.f32 %v1521, %v1536
    %v1538 = vadd.f32 %v1537, 0.112945676
    %v1539 = vmul.f32 %v1521, %v1538
    %v1540 = vadd.f32 %v1539, 0.4994258
    %v1541 = vmul.f32 %v1521, %v1540
    %v1542 = vadd.f32 %v1541, 1.0
    %v1543 = vrcp.pop %v1542
    %v1544 = vmul.f32 %v1542, %v1543
    %v1545 = vsub.f32 1.0, %v1544
    %v1546 = vmul.f32 %v1543, %v1545
    %v1547 = vadd.f32 %v1543, %v1546
    %vm1548 = vweird.f32 %v1542
    %vm1549 = vweird.f32 %v1543
    %vm1550 = vmor %vm1548, %vm1549
    %v1551 = vsel %vm1550, %v1543, %v1547
    %v1552 = vand.u32 2147483647, %v1542
    %vm1553 = vcmp.eq.f32.partialorder %v1552, 8.507059e+37
    %v1554 = vand.u32 %v1542, 2147483648
    %v1555 = vor.u32 1.1754944e-38, %v1554
    %v1556 = vsel %vm1553, %v1555, %v1551
    %v1557 = vmul.f32 %v1532, %v1556
    %v1558 = vmin.f32 %v1557, 1.0
    %v1559 = vmax.f32 %v1558, -1.0
    %v1560 = vadd.f32 %v1279, 1.0
    %v1561 = vadd.f32 %v1319, 1.0
    %v1562 = vadd.f32 %v1359, 1.0
    %v1563 = vadd.f32 %v1399, 1.0
    %v1564 = vadd.f32 %v1439, 1.0
    %v1565 = vadd.f32 %v1479, 1.0
    %v1566 = vadd.f32 %v1519, 1.0
    %v1567 = vadd.f32 %v1559, 1.0
    %v1568 = vmul.f32 %v1224, %v1560
    %v1569 = vmul.f32 %v1225, %v1561
    %v1570 = vmul.f32 %v1226, %v1562
    %v1571 = vmul.f32 %v1227, %v1563
    %v1572 = vmul.f32 %v1228, %v1564
    %v1573 = vmul.f32 %v1229, %v1565
    %v1574 = vmul.f32 %v1230, %v1566
    %v1575 = vmul.f32 %v1231, %v1567
    %v1576 = vpack.c.bf16 %v1572, %v1568
    %v1577 = vpack.c.bf16 %v1573, %v1569
    %v1578 = vpack.c.bf16 %v1574, %v1570
    %v1579 = vpack.c.bf16 %v1575, %v1571
    %v1580 = vld [vmem:[#allocation11] sm:$0xf]
    %v1581 = vld [vmem:[#allocation11 + $0x4] sm:$0xf]
    %v1582 = vld [vmem:[#allocation11 + $0x8] sm:$0xf]
    %v1583 = vld [vmem:[#allocation11 + $0xc] sm:$0xf]
    %v1584 = vld [vmem:[#allocation11 + $0x10] sm:$0xf]
    %v1585 = vld [vmem:[#allocation11 + $0x14] sm:$0xf]
    %v1586 = vld [vmem:[#allocation11 + $0x18] sm:$0xf]
    %v1587 = vld [vmem:[#allocation11 + $0x1c] sm:$0xf]
    %v1588 = vld [vmem:[#allocation11 + $0x20] sm:$0xf]
    %v1589 = vld [vmem:[#allocation11 + $0x24] sm:$0xf]
    %v1590 = vld [vmem:[#allocation11 + $0x28] sm:$0xf]
    %v1591 = vld [vmem:[#allocation11 + $0x2c] sm:$0xf]
    %v1592 = vld [vmem:[#allocation11 + $0x30] sm:$0xf]
    %v1593 = vld [vmem:[#allocation11 + $0x34] sm:$0xf]
    %v1594 = vld [vmem:[#allocation11 + $0x38] sm:$0xf]
    %v1595 = vld [vmem:[#allocation11 + $0x3c] sm:$0xf]
    %v1596 = vld [vmem:[#allocation11 + $0x40] sm:$0xf]
    %v1597 = vld [vmem:[#allocation11 + $0x44] sm:$0xf]
    %v1598 = vld [vmem:[#allocation11 + $0x48] sm:$0xf]
    %v1599 = vld [vmem:[#allocation11 + $0x4c] sm:$0xf]
    %v1600 = vld [vmem:[#allocation11 + $0x50] sm:$0xf]
    %v1601 = vld [vmem:[#allocation11 + $0x54] sm:$0xf]
    %v1602 = vld [vmem:[#allocation11 + $0x58] sm:$0xf]
    %v1603 = vld [vmem:[#allocation11 + $0x5c] sm:$0xf]
    %v1604 = vld [vmem:[#allocation11 + $0x60] sm:$0xf]
    %v1605 = vld [vmem:[#allocation11 + $0x64] sm:$0xf]
    %v1606 = vld [vmem:[#allocation11 + $0x68] sm:$0xf]
    %v1607 = vld [vmem:[#allocation11 + $0x6c] sm:$0xf]
    %v1608 = vld [vmem:[#allocation11 + $0x70] sm:$0xf]
    %v1609 = vld [vmem:[#allocation11 + $0x74] sm:$0xf]
    %v1610 = vld [vmem:[#allocation11 + $0x78] sm:$0xf]
    %v1611 = vld [vmem:[#allocation11 + $0x7c] sm:$0xf]
    %v1612 = vld [vmem:[#allocation11 + $0x80] sm:$0xf]
    %v1613 = vld [vmem:[#allocation11 + $0x84] sm:$0xf]
    %v1614 = vld [vmem:[#allocation11 + $0x88] sm:$0xf]
    %v1615 = vld [vmem:[#allocation11 + $0x8c] sm:$0xf]
    %v1616 = vld [vmem:[#allocation11 + $0x90] sm:$0xf]
    %v1617 = vld [vmem:[#allocation11 + $0x94] sm:$0xf]
    %v1618 = vld [vmem:[#allocation11 + $0x98] sm:$0xf]
    %v1619 = vld [vmem:[#allocation11 + $0x9c] sm:$0xf]
    %v1620 = vld [vmem:[#allocation11 + $0xa0] sm:$0xf]
    %v1621 = vld [vmem:[#allocation11 + $0xa4] sm:$0xf]
    %v1622 = vld [vmem:[#allocation11 + $0xa8] sm:$0xf]
    %v1623 = vld [vmem:[#allocation11 + $0xac] sm:$0xf]
    %v1624 = vld [vmem:[#allocation11 + $0xb0] sm:$0xf]
    %v1625 = vld [vmem:[#allocation11 + $0xb4] sm:$0xf]
    %v1626 = vld [vmem:[#allocation11 + $0xb8] sm:$0xf]
    %v1627 = vld [vmem:[#allocation11 + $0xbc] sm:$0xf]
    %v1628 = vld [vmem:[#allocation11 + $0xc0] sm:$0xf]
    %v1629 = vld [vmem:[#allocation11 + $0xc4] sm:$0xf]
    %v1630 = vld [vmem:[#allocation11 + $0xc8] sm:$0xf]
    %v1631 = vld [vmem:[#allocation11 + $0xcc] sm:$0xf]
    %v1632 = vld [vmem:[#allocation11 + $0xd0] sm:$0xf]
    %v1633 = vld [vmem:[#allocation11 + $0xd4] sm:$0xf]
    %v1634 = vld [vmem:[#allocation11 + $0xd8] sm:$0xf]
    %v1635 = vld [vmem:[#allocation11 + $0xdc] sm:$0xf]
    %v1636 = vld [vmem:[#allocation11 + $0xe0] sm:$0xf]
    %v1637 = vld [vmem:[#allocation11 + $0xe4] sm:$0xf]
    %v1638 = vld [vmem:[#allocation11 + $0xe8] sm:$0xf]
    %v1639 = vld [vmem:[#allocation11 + $0xec] sm:$0xf]
    %v1640 = vld [vmem:[#allocation11 + $0xf0] sm:$0xf]
    %v1641 = vld [vmem:[#allocation11 + $0xf4] sm:$0xf]
    %v1642 = vld [vmem:[#allocation11 + $0xf8] sm:$0xf]
    %v1643 = vld [vmem:[#allocation11 + $0xfc] sm:$0xf]
    %v1644 = vld [vmem:[%s10] sm:$0x1]
    %v1646 = vperm.slane %v1644, 0
    %v1712 = vunpack.c.l.b16 %v1580
    %v1713 = vunpack.c.l.b16 %v1581
    %v1714 = vunpack.c.l.b16 %v1582
    %v1715 = vunpack.c.l.b16 %v1583
    %v1716 = vunpack.c.l.b16 %v1584
    %v1717 = vunpack.c.l.b16 %v1585
    %v1718 = vunpack.c.l.b16 %v1586
    %v1719 = vunpack.c.l.b16 %v1587
    %v1720 = vunpack.c.l.b16 %v1588
    %v1721 = vunpack.c.l.b16 %v1589
    %v1722 = vunpack.c.l.b16 %v1590
    %v1723 = vunpack.c.l.b16 %v1591
    %v1724 = vunpack.c.l.b16 %v1592
    %v1725 = vunpack.c.l.b16 %v1593
    %v1726 = vunpack.c.l.b16 %v1594
    %v1727 = vunpack.c.l.b16 %v1595
    %v1728 = vunpack.c.l.b16 %v1596
    %v1729 = vunpack.c.l.b16 %v1597
    %v1730 = vunpack.c.l.b16 %v1598
    %v1731 = vunpack.c.l.b16 %v1599
    %v1732 = vunpack.c.l.b16 %v1600
    %v1733 = vunpack.c.l.b16 %v1601
    %v1734 = vunpack.c.l.b16 %v1602
    %v1735 = vunpack.c.l.b16 %v1603
    %v1736 = vunpack.c.l.b16 %v1604
    %v1737 = vunpack.c.l.b16 %v1605
    %v1738 = vunpack.c.l.b16 %v1606
    %v1739 = vunpack.c.l.b16 %v1607
    %v1740 = vunpack.c.l.b16 %v1608
    %v1741 = vunpack.c.l.b16 %v1609
    %v1742 = vunpack.c.l.b16 %v1610
    %v1743 = vunpack.c.l.b16 %v1611
    %v1744 = vunpack.c.l.b16 %v1612
    %v1745 = vunpack.c.l.b16 %v1613
    %v1746 = vunpack.c.l.b16 %v1614
    %v1747 = vunpack.c.l.b16 %v1615
    %v1748 = vunpack.c.l.b16 %v1616
    %v1749 = vunpack.c.l.b16 %v1617
    %v1750 = vunpack.c.l.b16 %v1618
    %v1751 = vunpack.c.l.b16 %v1619
    %v1752 = vunpack.c.l.b16 %v1620
    %v1753 = vunpack.c.l.b16 %v1621
    %v1754 = vunpack.c.l.b16 %v1622
    %v1755 = vunpack.c.l.b16 %v1623
    %v1756 = vunpack.c.l.b16 %v1624
    %v1757 = vunpack.c.l.b16 %v1625
    %v1758 = vunpack.c.l.b16 %v1626
    %v1759 = vunpack.c.l.b16 %v1627
    %v1760 = vunpack.c.l.b16 %v1628
    %v1761 = vunpack.c.l.b16 %v1629
    %v1762 = vunpack.c.l.b16 %v1630
    %v1763 = vunpack.c.l.b16 %v1631
    %v1764 = vunpack.c.l.b16 %v1632
    %v1765 = vunpack.c.l.b16 %v1633
    %v1766 = vunpack.c.l.b16 %v1634
    %v1767 = vunpack.c.l.b16 %v1635
    %v1768 = vunpack.c.l.b16 %v1636
    %v1769 = vunpack.c.l.b16 %v1637
    %v1770 = vunpack.c.l.b16 %v1638
    %v1771 = vunpack.c.l.b16 %v1639
    %v1772 = vunpack.c.l.b16 %v1640
    %v1773 = vunpack.c.l.b16 %v1641
    %v1774 = vunpack.c.l.b16 %v1642
    %v1775 = vunpack.c.l.b16 %v1643
    %v1776 = vpack.c.b16 %v1713, %v1712
    %v1777 = vpack.c.b16 %v1715, %v1714
    %v1778 = vpack.c.b16 %v1717, %v1716
    %v1779 = vpack.c.b16 %v1719, %v1718
    %v1780 = vpack.c.b16 %v1721, %v1720
    %v1781 = vpack.c.b16 %v1723, %v1722
    %v1782 = vpack.c.b16 %v1725, %v1724
    %v1783 = vpack.c.b16 %v1727, %v1726
    %v1784 = vpack.c.b16 %v1729, %v1728
    %v1785 = vpack.c.b16 %v1731, %v1730
    %v1786 = vpack.c.b16 %v1733, %v1732
    %v1787 = vpack.c.b16 %v1735, %v1734
    %v1788 = vpack.c.b16 %v1737, %v1736
    %v1789 = vpack.c.b16 %v1739, %v1738
    %v1790 = vpack.c.b16 %v1741, %v1740
    %v1791 = vpack.c.b16 %v1743, %v1742
    %v1792 = vpack.c.b16 %v1745, %v1744
    %v1793 = vpack.c.b16 %v1747, %v1746
    %v1794 = vpack.c.b16 %v1749, %v1748
    %v1795 = vpack.c.b16 %v1751, %v1750
    %v1796 = vpack.c.b16 %v1753, %v1752
    %v1797 = vpack.c.b16 %v1755, %v1754
    %v1798 = vpack.c.b16 %v1757, %v1756
    %v1799 = vpack.c.b16 %v1759, %v1758
    %v1800 = vpack.c.b16 %v1761, %v1760
    %v1801 = vpack.c.b16 %v1763, %v1762
    %v1802 = vpack.c.b16 %v1765, %v1764
    %v1803 = vpack.c.b16 %v1767, %v1766
    %v1804 = vpack.c.b16 %v1769, %v1768
    %v1805 = vpack.c.b16 %v1771, %v1770
    %v1806 = vpack.c.b16 %v1773, %v1772
    %v1807 = vpack.c.b16 %v1775, %v1774
    %1840 = vmatpush.bf16.msra.mxu0 %v1783
    %1841 = vmatpush.bf16.msra.mxu0 %v1782
    %1842 = vmatpush.bf16.msra.mxu0 %v1781
    %1843 = vmatpush.bf16.msra.mxu0 %v1780
    %1844 = vmatpush.bf16.msra.mxu0 %v1779
    %1845 = vmatpush.bf16.msra.mxu0 %v1778
    %1846 = vmatpush.bf16.msra.mxu0 %v1777
    %1847 = vmatpush.bf16.msra.mxu0 %v1776
    %1848 = vmatmul.bf16.gmra.mxu0 %v1576
    %v1849 = vpop.f32.mrf.mxu0
    %v1850 = vadd.f32 %v1646, %v1849
    %v1851 = vpop.f32.mrf.mxu0
    %v1852 = vadd.f32 %v1646, %v1851
    %1853 = vdwg.mxu0
    %1854 = vmatpush.bf16.msra.mxu0 %v1791
    %1855 = vmatpush.bf16.msra.mxu0 %v1790
    %1856 = vmatpush.bf16.msra.mxu0 %v1789
    %1857 = vmatpush.bf16.msra.mxu0 %v1788
    %1858 = vmatpush.bf16.msra.mxu0 %v1787
    %1859 = vmatpush.bf16.msra.mxu0 %v1786
    %1860 = vmatpush.bf16.msra.mxu0 %v1785
    %1861 = vmatpush.bf16.msra.mxu0 %v1784
    %1862 = vmatmul.bf16.gmra.mxu0 %v1577
    %v1863 = vpop.f32.mrf.mxu0
    %v1864 = vadd.f32 %v1850, %v1863
    %v1865 = vpop.f32.mrf.mxu0
    %v1866 = vadd.f32 %v1852, %v1865
    %1867 = vdwg.mxu0
    %1868 = vmatpush.bf16.msra.mxu0 %v1799
    %1869 = vmatpush.bf16.msra.mxu0 %v1798
    %1870 = vmatpush.bf16.msra.mxu0 %v1797
    %1871 = vmatpush.bf16.msra.mxu0 %v1796
    %1872 = vmatpush.bf16.msra.mxu0 %v1795
    %1873 = vmatpush.bf16.msra.mxu0 %v1794
    %1874 = vmatpush.bf16.msra.mxu0 %v1793
    %1875 = vmatpush.bf16.msra.mxu0 %v1792
    %1876 = vmatmul.bf16.gmra.mxu0 %v1578
    %v1877 = vpop.f32.mrf.mxu0
    %v1878 = vadd.f32 %v1864, %v1877
    %v1879 = vpop.f32.mrf.mxu0
    %v1880 = vadd.f32 %v1866, %v1879
    %1881 = vdwg.mxu0
    %1882 = vmatpush.bf16.msra.mxu0 %v1807
    %1883 = vmatpush.bf16.msra.mxu0 %v1806
    %1884 = vmatpush.bf16.msra.mxu0 %v1805
    %1885 = vmatpush.bf16.msra.mxu0 %v1804
    %1886 = vmatpush.bf16.msra.mxu0 %v1803
    %1887 = vmatpush.bf16.msra.mxu0 %v1802
    %1888 = vmatpush.bf16.msra.mxu0 %v1801
    %1889 = vmatpush.bf16.msra.mxu0 %v1800
    %1890 = vmatmul.bf16.gmra.mxu0 %v1579
    %v1891 = vpop.f32.mrf.mxu0
    %v1892 = vadd.f32 %v1878, %v1891
    %v1893 = vpop.f32.mrf.mxu0
    %v1894 = vadd.f32 %v1880, %v1893
    %1895 = vdwg.mxu0
    %v1896 = vadd.f32 %v963, %v1892
    %v1897 = vadd.f32 %v964, %v1894
    %v1898 = vld [vmem:[%s11] sm:$0x1]
    %v1899 = vld [vmem:[%s12] sm:$0x1]
    %1900 = vadd.xlane.f32.xlu0 %v1896
    %v1901 = vpop.xlane.xlu0 %1900
    %1902 = vadd.xlane.f32.xlu0 %v1897
    %v1903 = vpop.xlane.xlu0 %1902
    %v1904 = vmul.f32 %v1901, %v918
    %v1905 = vmul.f32 %v1903, %v918
    %v1906 = vsub.f32 %v1896, %v1904
    %v1907 = vsub.f32 %v1897, %v1905
    %v1908 = vmul.f32 %v1906, %v1906
    %v1909 = vmul.f32 %v1907, %v1907
    %1910 = vadd.xlane.f32.xlu0 %v1908
    %v1911 = vpop.xlane.xlu0 %1910
    %1912 = vadd.xlane.f32.xlu0 %v1909
    %v1913 = vpop.xlane.xlu0 %1912
    %v1914 = vmul.f32 %v1911, %v918
    %v1915 = vmul.f32 %v1913, %v918
    %v1916 = vadd.f32 %v1914, 1e-05
    %v1917 = vadd.f32 %v1915, 1e-05
    %v1918 = vrsqrt.pop %v1916
    %v1919 = vmul.f32 %v1918, %v1916
    %v1920 = vmul.f32 %v1919, %v1918
    %v1921 = vmul.f32 0.5, %v1920
    %v1922 = vsub.f32 1.5, %v1921
    %v1923 = vmul.f32 %v1918, %v1922
    %vm1924 = vweird.f32 %v1916
    %vm1925 = vweird.f32 %v1918
    %vm1926 = vmor %vm1924, %vm1925
    %v1927 = vsel %vm1926, %v1918, %v1923
    %v1928 = vrsqrt.pop %v1917
    %v1929 = vmul.f32 %v1928, %v1917
    %v1930 = vmul.f32 %v1929, %v1928
    %v1931 = vmul.f32 0.5, %v1930
    %v1932 = vsub.f32 1.5, %v1931
    %v1933 = vmul.f32 %v1928, %v1932
    %vm1934 = vweird.f32 %v1917
    %vm1935 = vweird.f32 %v1928
    %vm1936 = vmor %vm1934, %vm1935
    %v1937 = vsel %vm1936, %v1928, %v1933
    %v1938 = vmul.f32 %v1906, %v1927
    %v1939 = vmul.f32 %v1907, %v1937
    %v1941 = vperm.slane %v1898, 0
    %v1943 = vmul.f32 %v1938, %v1941
    %v1944 = vmul.f32 %v1939, %v1941
    %v1946 = vperm.slane %v1899, 0
    %v1948 = vadd.f32 %v1943, %v1946
    %v1949 = vadd.f32 %v1944, %v1946
    %1950 = vst [vmem:[#allocation13] sm:$0xff] %v1948
    %1951 = vst [vmem:[#allocation13 + $0x8] sm:$0xff] %v1949
    // Predicated region
    $region78: #{tpu_custom_call.1} parent=1 // pred_check
      _
    $region79: #{tpu_custom_call.1} parent=1 // pred_check_branch
      %1953 = sbr.rel (0) target = $region81
    $region80: #{tpu_custom_call.1} parent=1 // pred_region
      %1955 = vsyncadd [#allocation4], 0
      %s1956 = sshll.u32 [#allocation13], 4
      %s1957 = int_to_ptr.vmem [resolvable:$true] %s1956
      %s1958 = sshll.u32 %s13, 4
      %s1959 = int_to_ptr.hbm [resolvable:$true] %s1958
      %1964 = dma.vmem_to_hbm [thread:$0]  %s1957, 256, %s1959, [#allocation4], 128, 128, 8
    $region81: #{tpu_custom_call.1} parent=1 // pred_fallthru
      _
    // Predicated region
    $region82: #{tpu_custom_call.1} parent=1 // pred_check
      _
    $region83: #{tpu_custom_call.1} parent=1 // pred_check_branch
      %1966 = sbr.rel (0) target = $region85
    $region84: #{tpu_custom_call.1} parent=1 // pred_region
      %1968 = dma.done [#allocation4], 256
    $region85: #{tpu_custom_call.1} parent=1 // pred_fallthru
      _
    %1969 = vsyncpa [#allocation3], 1
    %1970 = vsyncpa [#allocation6], 1
    %1971 = vsyncpa [#allocation9], 1
    %1972 = vsyncpa [#allocation12], 1
    %1973 = vsyncpa [#allocation4], 1

</llo_original>
